<compile_context>
chip_gen: v7x
topology: tpu7x:2x2x1
jax: 0.10.0
libtpu: 0.0.40
codegen_flags: <defaults>
</compile_context>

<pallas_src>
import functools

import jax
import jax.numpy as jnp
from jax.experimental import pallas as pl
from jax.experimental.pallas import tpu as pltpu


def _round_up(x, m):
    return ((x + m - 1) // m) * m


# ----------------------------------------------------------------------------
# Pallas kernel: unbalanced Sinkhorn OT + matches, BB batch pairs per grid step
# ----------------------------------------------------------------------------
def _uot_kernel(eps_ref, gamma_ref, f1_ref, f2_ref, c2_ref,
                T_ref, aux_ref, *, nb_iter, n_true, m_true, use_bf16_mxu):
    eps = eps_ref[0]
    gam = gamma_ref[0]

    f1 = f1_ref[...]                       # (BB, Np, C)
    f2 = f2_ref[...]                       # (BB, Mp, C)
    BB, Np, _ = f1.shape
    Mp = f2.shape[1]

    # L2 normalize features (matches torch: x / sqrt(sum(x^2) + 1e-8)).
    f1n = f1 * jax.lax.rsqrt(jnp.sum(f1 * f1, axis=-1, keepdims=True) + 1e-8)
    f2n = f2 * jax.lax.rsqrt(jnp.sum(f2 * f2, axis=-1, keepdims=True) + 1e-8)

    # Cost matrix on the MXU (contraction over C, no materialized f2^T).
    if use_bf16_mxu:
        dots = jnp.einsum('bnc,bmc->bnm',
                          f1n.astype(jnp.bfloat16), f2n.astype(jnp.bfloat16),
                          preferred_element_type=jnp.float32)
    else:
        dots = jnp.einsum('bnc,bmc->bnm', f1n, f2n,
                          preferred_element_type=jnp.float32)
    Cmat = 1.0 - dots                                         # (BB, Np, Mp)

    # Gibbs kernel: one scalar reciprocal, then a VPU multiply + EUP exp.
    neg_inv_eps = -(1.0 / eps)
    K = jnp.exp(Cmat * neg_inv_eps)

    # Separable rank-1 padding masks (no (Np,Mp) iota / bool temporaries).
    if Np != n_true:
        rmask = (jax.lax.broadcasted_iota(jnp.int32, (Np, 1), 0)
                 < n_true).astype(jnp.float32)
        K = K * rmask[None, :, :]
    if Mp != m_true:
        cmask = (jax.lax.broadcasted_iota(jnp.int32, (1, Mp), 1)
                 < m_true).astype(jnp.float32)
        K = K * cmask[None, :, :]

    power = gam / (gam + eps)
    inv_n = 1.0 / float(n_true)
    inv_m = 1.0 / float(m_true)

    if nb_iter == 0:
        T = K
        rs_col = jnp.sum(K, axis=2, keepdims=True)            # (BB, Np, 1)
    else:
        # a is a column, b is a row; both Sinkhorn mat-vecs run on the
        # VPU/XLU (broadcast-multiply + reduce), keeping the MXU free and
        # avoiding any K transpose.
        a_col = jnp.full((BB, Np, 1), inv_n, dtype=jnp.float32)
        b_row = jnp.full((BB, 1, Mp), 1.0, dtype=jnp.float32)
        kb = None
        for _ in range(nb_iter):                              # small static unroll
            kta = jnp.sum(K * a_col, axis=1, keepdims=True)   # K^T a  -> (BB,1,Mp)
            b_row = jnp.power(inv_m / (kta + 1e-8), power)
            kb = jnp.sum(K * b_row, axis=2, keepdims=True)    # K b    -> (BB,Np,1)
            a_col = jnp.power(inv_n / (kb + 1e-8), power)
        T = (a_col * K) * b_row                               # (BB, Np, Mp)
        # row_sum = a ⊙ (K b): reuse the last mat-vec, no extra reduction.
        rs_col = a_col * kb                                   # (BB, Np, 1)

    T_ref[...] = T.astype(T_ref.dtype)

    # Matches: T @ coords2 (tiny rhs); normalized with exact division since
    # this feeds the SVD rigid transform.
    c2 = c2_ref[...]                                          # (BB, Mp, 3)
    if use_bf16_mxu:
        matches = jnp.einsum('bnm,bmd->bnd',
                             T.astype(jnp.bfloat16), c2.astype(jnp.bfloat16),
                             preferred_element_type=jnp.float32)
    else:
        matches = jnp.einsum('bnm,bmd->bnd', T, c2,
                             preferred_element_type=jnp.float32)
    matches = matches / (rs_col + 1e-8)
    # Merged lane-packed aux output [row_sum | matches] -> (BB, Np, 4).
    # (tiny slab; the concatenate cost is negligible)
    aux_ref[...] = jnp.concatenate([rs_col, matches], axis=-1)


# ----------------------------------------------------------------------------
# Generation-aware VMEM sizing
# ----------------------------------------------------------------------------
def _tpu_vmem_capacity_bytes():
    try:
        info = pltpu.get_tpu_info()
        cap = getattr(info, "vmem_capacity_bytes", None)
        if cap:
            return int(cap)
    except Exception:
        pass
    return 64 << 20   # conservative default (v7x per-core VMEM)


def _vmem_bytes_per_pair(Np, Mp, C, t_bytes=4, t_buffers=2):
    """f32 working set for one batch pair inside one grid step (lane-padded)."""
    f32 = 4
    lane = 128
    Cp = _round_up(C, lane)
    nm = Np * Mp
    raw = (
        f32 * nm                      # K (Gibbs kernel)
        + f32 * nm                    # K*a / K*b product temp of the VPU reduces
        + f32 * nm                    # T
        + t_buffers * t_bytes * nm    # pipelined transport output buffers
        + 3 * f32 * (Np + Mp) * Cp    # feature input buffers (x2) + normalized
        + 2 * f32 * Mp * lane         # coords2 input buffers (3 lanes -> 128)
        + 2 * f32 * Np * lane         # aux output buffers (4 lanes -> 128)
        + 2 * f32 * (Np + Mp) * lane  # a/kb columns, b/kta rows (lane-padded)
    )
    return int(1.25 * raw)            # safety factor for compiler scratch etc.


def _choose_pairs_per_block(B, per_pair_bytes, budget_bytes, max_bb=32):
    bb = max(1, min(max_bb, B, budget_bytes // max(1, per_pair_bytes)))
    # Keep >= 2 grid steps when possible so the "parallel" batch axis can
    # shard across the two TensorCores on v7x-class chips.
    if B > 1:
        bb = min(bb, (B + 1) // 2)
    return int(max(1, bb))


# ----------------------------------------------------------------------------
# Wrapper
# ----------------------------------------------------------------------------
def sinkhorn_unbalanced_pallas(feat1, feat2, coords2, eps, gamma, nb_iter,
                               transport_dtype=jnp.float32,
                               use_bf16_mxu=False):
    """feat1: (B, N, C), feat2: (B, M, C), coords2: (B, M, 3); eps/gamma: (1,).

    Returns (transport (B,N,M), row_sum (B,N,1), matches (B,N,3))."""
    B, N, C = feat1.shape
    _, M, _ = feat2.shape

    # Pad: M -> multiple of 128 (lane-dense transport writeback),
    #      N -> multiple of 8 (sublane alignment). Padding is masked in-kernel.
    Np = _round_up(N, 8)
    Mp = _round_up(M, 128)

    t_bytes = jnp.dtype(transport_dtype).itemsize
    capacity = _tpu_vmem_capacity_bytes()
    budget = int(0.75 * capacity)      # ~96 MiB on v5e/v6e, ~48 MiB on v7x

    t_buffers = 2
    per_pair = _vmem_bytes_per_pair(Np, Mp, C, t_bytes, t_buffers)
    if per_pair > budget:
        # VMEM-tight: single-buffer the transport output as a stopgap.
        t_buffers = 1
        per_pair = _vmem_bytes_per_pair(Np, Mp, C, t_bytes, t_buffers)
    # TODO(synk): for very large N*M (per_pair still > budget) an inner N-tile
    # that recomputes K tiles from the small (N,C)/(M,C) features inside the
    # Sinkhorn loop (flash-attention style) would be required; not implemented.

    BB = _choose_pairs_per_block(B, per_pair, budget)
    Bp = _round_up(B, BB)

    f1p = jnp.pad(feat1.astype(jnp.float32), ((0, Bp - B), (0, Np - N), (0, 0)))
    f2p = jnp.pad(feat2.astype(jnp.float32), ((0, Bp - B), (0, Mp - M), (0, 0)))
    c2p = jnp.pad(coords2.astype(jnp.float32), ((0, Bp - B), (0, Mp - M), (0, 0)))

    vmem_limit = int(min(int(0.9 * capacity),
                         max(32 << 20, BB * per_pair + (4 << 20))))

    if t_buffers == 1:
        t_spec = pl.BlockSpec((BB, Np, Mp), lambda b: (b, 0, 0),
                              pipeline_mode=pl.Buffered(1))
    else:
        t_spec = pl.BlockSpec((BB, Np, Mp), lambda b: (b, 0, 0))

    kernel = functools.partial(_uot_kernel, nb_iter=nb_iter, n_true=N,
                               m_true=M, use_bf16_mxu=use_bf16_mxu)
    T_full, aux_full = pl.pallas_call(
        kernel,
        grid=(Bp // BB,),
        in_specs=[
            pl.BlockSpec(memory_space=pltpu.MemorySpace.SMEM),        # eps
            pl.BlockSpec(memory_space=pltpu.MemorySpace.SMEM),        # gamma
            pl.BlockSpec((BB, Np, C), lambda b: (b, 0, 0)),           # feat1
            pl.BlockSpec((BB, Mp, C), lambda b: (b, 0, 0)),           # feat2
            pl.BlockSpec((BB, Mp, 3), lambda b: (b, 0, 0)),           # coords2
        ],
        out_specs=[
            t_spec,                                                   # transport
            pl.BlockSpec((BB, Np, 4), lambda b: (b, 0, 0)),           # [rs|match]
        ],
        out_shape=[
            jax.ShapeDtypeStruct((Bp, Np, Mp), transport_dtype),
            jax.ShapeDtypeStruct((Bp, Np, 4), jnp.float32),
        ],
        compiler_params=pltpu.CompilerParams(
            dimension_semantics=("parallel",),      # pairs are independent
            vmem_limit_bytes=vmem_limit,
        ),
    )(eps.astype(jnp.float32), gamma.astype(jnp.float32), f1p, f2p, c2p)

    transport = T_full[:B, :N, :M].astype(jnp.float32)
    row_sum = aux_full[:B, :N, 0:1]
    matches = aux_full[:B, :N, 1:4]
    return transport, row_sum, matches


# ----------------------------------------------------------------------------
# Weighted rigid transform via 3x3 SVD (plain JAX glue)
# ----------------------------------------------------------------------------
# TODO(synk): 3x3 SVD / determinant has no clean Pallas equivalent; done in JAX.
def compute_rigid_transform(points1, points2, weights):
    w = weights[..., None]                                      # (B, M, 1)
    wn = w / (jnp.sum(w, axis=1, keepdims=True) + 1e-5)
    centroid_a = jnp.sum(points1 * wn, axis=1)                  # (B, 3)
    centroid_b = jnp.sum(points2 * wn, axis=1)
    a_c = points1 - centroid_a[:, None, :]
    b_c = points2 - centroid_b[:, None, :]
    cov = jnp.matmul(jnp.swapaxes(a_c, -2, -1), b_c * wn)       # (B, 3, 3)

    u, s, vh = jnp.linalg.svd(cov, full_matrices=True)
    v = jnp.swapaxes(vh, -2, -1)                                # torch.svd's V
    rot_pos = v @ jnp.swapaxes(u, -1, -2)
    v_neg = v.at[:, :, 2].multiply(-1.0)
    rot_neg = v_neg @ jnp.swapaxes(u, -1, -2)
    det_pos = jnp.linalg.det(rot_pos)
    rot = jnp.where(det_pos[:, None, None] > 0, rot_pos, rot_neg)

    translation = -rot @ centroid_a[..., None] + centroid_b[..., None]
    return jnp.concatenate([rot, translation], axis=2)          # (B, 3, 4)


# ----------------------------------------------------------------------------
# UOTHead forward (use_svd=True, sinkhorn_type='unbalanced')
# ----------------------------------------------------------------------------
def uot_head_forward(batch_dict, epsilon_param, gamma_param, nb_iter=5,
                     src_coords=None, transport_dtype=jnp.float32,
                     use_bf16_mxu=False):
    feats = batch_dict['point_features'][..., 0]      # (2B, C, NUM)
    twoB, C, NUM = feats.shape
    assert twoB % 2 == 0
    B = twoB // 2

    feat1 = jnp.transpose(feats[:B], (0, 2, 1)).astype(jnp.float32)   # (B, NUM, C)
    feat2 = jnp.transpose(feats[B:], (0, 2, 1)).astype(jnp.float32)

    coords = batch_dict['point_coords'].reshape(twoB, -1, 4)
    coords1 = coords[:B, :, 1:].astype(jnp.float32)    # (B, NUM, 3)
    coords2 = coords[B:, :, 1:].astype(jnp.float32)

    eps = jnp.exp(epsilon_param) + 0.03                # (1,)
    gamma = jnp.exp(gamma_param)                       # (1,)

    transport, row_sum, sinkhorn_matches = sinkhorn_unbalanced_pallas(
        feat1, feat2, coords2, eps, gamma, nb_iter,
        transport_dtype=transport_dtype, use_bf16_mxu=use_bf16_mxu)

    if src_coords is None:
        src_coords = coords1
    transformation = compute_rigid_transform(src_coords, sinkhorn_matches,
                                             row_sum[..., 0])

    out = dict(batch_dict)
    out['sinkhorn_matches'] = sinkhorn_matches
    out['transport'] = transport
    out['transformation'] = transformation
    out['out_rotation'] = None
    out['out_translation'] = None
    return out


if __name__ == "__main__":
    key = jax.random.PRNGKey(0)
    k1, k2 = jax.random.split(key)

    twoB, C, NUM = 4, 32, 64                          # 2 anchor + 2 positive
    point_features = jax.random.normal(k1, (twoB, C, NUM, 1), dtype=jnp.float32)
    xyz = jax.random.uniform(k2, (twoB, NUM, 3), dtype=jnp.float32) * 10.0
    batch_idx = jnp.broadcast_to(
        jnp.arange(twoB, dtype=jnp.float32)[:, None, None], (twoB, NUM, 1))
    point_coords = jnp.concatenate([batch_idx, xyz], axis=-1)   # (2B, NUM, 4)

    # Deterministic parameter init as in UOTHead.__init__ (zeros).
    epsilon_param = jnp.zeros((1,), jnp.float32)
    gamma_param = jnp.zeros((1,), jnp.float32)

    batch_dict = {'point_features': point_features, 'point_coords': point_coords}
    out = uot_head_forward(batch_dict, epsilon_param, gamma_param, nb_iter=5)

    jax.block_until_ready(out['transformation'])
    jax.block_until_ready(out['transport'])
    jax.block_until_ready(out['sinkhorn_matches'])

    # Sanity checks mirroring the torch assert: rotations must be proper.
    dets = jnp.linalg.det(out['transformation'][:, :, :3])
    assert bool(jnp.all(dets > 0))
    assert bool(jnp.all(jnp.isfinite(out['transport'])))
    assert bool(jnp.all(jnp.isfinite(out['sinkhorn_matches'])))

    print("KERNEL_OK")
</pallas_src>

<mosaic_0001>
module attributes {stable_mosaic.version = 11 : i64} {
  func.func @_uot_kernel(%arg0: i32, %arg1: memref<1xf32, #tpu.memory_space<smem>>, %arg2: memref<1xf32, #tpu.memory_space<smem>>, %arg3: memref<1x64x32xf32, #tpu.memory_space<vmem>>, %arg4: memref<1x128x32xf32, #tpu.memory_space<vmem>>, %arg5: memref<1x128x3xf32, #tpu.memory_space<vmem>>, %arg6: memref<1x64x128xf32, #tpu.memory_space<vmem>>, %arg7: memref<1x64x4xf32, #tpu.memory_space<vmem>>) attributes {dimension_semantics = [#tpu.dimension_semantics<parallel>], iteration_bounds = array<i64: 2>, scalar_prefetch = 0 : i64, scratch_operands = 0 : i64, tpu.core_type = #tpu.core_type<tc>, window_params = [{transform_indices = @transform_0, window_bounds = array<i64: 1>}, {transform_indices = @transform_1, window_bounds = array<i64: 1>}, {transform_indices = @transform_2, window_bounds = array<i64: 1, 64, 32>}, {transform_indices = @transform_3, window_bounds = array<i64: 1, 128, 32>}, {transform_indices = @transform_4, window_bounds = array<i64: 1, 128, 3>}, {transform_indices = @transform_5, window_bounds = array<i64: 1, 64, 128>}, {transform_indices = @transform_6, window_bounds = array<i64: 1, 64, 4>}]} {
    %c0 = arith.constant 0 : index
    %0 = memref.load %arg1[%c0] : memref<1xf32, #tpu.memory_space<smem>>
    %c0_0 = arith.constant 0 : index
    %1 = memref.load %arg2[%c0_0] : memref<1xf32, #tpu.memory_space<smem>>
    %c0_1 = arith.constant 0 : index
    %c0_2 = arith.constant 0 : index
    %c0_3 = arith.constant 0 : index
    %2 = vector.load %arg3[%c0_1, %c0_2, %c0_3] : memref<1x64x32xf32, #tpu.memory_space<vmem>>, vector<1x64x32xf32>
    %c0_4 = arith.constant 0 : index
    %c0_5 = arith.constant 0 : index
    %c0_6 = arith.constant 0 : index
    %3 = vector.load %arg4[%c0_4, %c0_5, %c0_6] : memref<1x128x32xf32, #tpu.memory_space<vmem>>, vector<1x128x32xf32>
    %4 = arith.mulf %2, %2 : vector<1x64x32xf32>
    %cst = arith.constant dense<0.000000e+00> : vector<1x64xf32>
    %5 = vector.multi_reduction <add>, %4, %cst [2] : vector<1x64x32xf32> to vector<1x64xf32>
    %6 = vector.shape_cast %5 : vector<1x64xf32> to vector<1x64x1xf32>
    %cst_7 = arith.constant 9.99999993E-9 : f32
    %7 = vector.broadcast %cst_7 : f32 to vector<1x64x1xf32>
    %8 = arith.addf %6, %7 : vector<1x64x1xf32>
    %9 = math.rsqrt %8 : vector<1x64x1xf32>
    %10 = vector.broadcast %9 : vector<1x64x1xf32> to vector<1x64x32xf32>
    %11 = arith.mulf %2, %10 : vector<1x64x32xf32>
    %12 = arith.mulf %3, %3 : vector<1x128x32xf32>
    %cst_8 = arith.constant dense<0.000000e+00> : vector<1x128xf32>
    %13 = vector.multi_reduction <add>, %12, %cst_8 [2] : vector<1x128x32xf32> to vector<1x128xf32>
    %14 = vector.shape_cast %13 : vector<1x128xf32> to vector<1x128x1xf32>
    %cst_9 = arith.constant 9.99999993E-9 : f32
    %15 = vector.broadcast %cst_9 : f32 to vector<1x128x1xf32>
    %16 = arith.addf %14, %15 : vector<1x128x1xf32>
    %17 = math.rsqrt %16 : vector<1x128x1xf32>
    %18 = vector.broadcast %17 : vector<1x128x1xf32> to vector<1x128x32xf32>
    %19 = arith.mulf %3, %18 : vector<1x128x32xf32>
    "tpu.trace_start"() <{level = 10 : i32, message = "bnc,bmc->bnm"}> : () -> ()
    %cst_10 = arith.constant dense<0.000000e+00> : vector<1x64x128xf32>
    %20 = tpu.matmul %11, %19, %cst_10 {dimension_numbers = #tpu.dot_dimension_numbers<[2], [2], [1], [1], [0, 0, 0, 1, 1, 1], [0], [0]>} : vector<1x64x32xf32>, vector<1x128x32xf32>, vector<1x64x128xf32> -> vector<1x64x128xf32>
    "tpu.trace_stop"() : () -> ()
    %cst_11 = arith.constant 1.000000e+00 : f32
    %21 = vector.broadcast %cst_11 : f32 to vector<1x64x128xf32>
    %22 = arith.subf %21, %20 : vector<1x64x128xf32>
    %cst_12 = arith.constant 1.000000e+00 : f32
    %23 = arith.divf %cst_12, %0 : f32
    %cst_13 = arith.constant 0.000000e+00 : f32
    %24 = arith.subf %cst_13, %23 : f32
    %25 = vector.broadcast %24 : f32 to vector<1x64x128xf32>
    %26 = arith.mulf %22, %25 : vector<1x64x128xf32>
    %27 = math.exp %26 : vector<1x64x128xf32>
    %28 = tpu.iota {dimensions = array<i32: 1>} : vector<1x128xi32>
    %c64_i32 = arith.constant 64 : i32
    %29 = vector.broadcast %c64_i32 : i32 to vector<1x128xi32>
    %30 = arith.cmpi slt, %28, %29 : vector<1x128xi32>
    %31 = arith.extui %30 : vector<1x128xi1> to vector<1x128xi32>
    %32 = arith.sitofp %31 : vector<1x128xi32> to vector<1x128xf32>
    %33 = vector.shape_cast %32 : vector<1x128xf32> to vector<1x1x128xf32>
    %34 = vector.broadcast %33 : vector<1x1x128xf32> to vector<1x64x128xf32>
    %35 = arith.mulf %27, %34 : vector<1x64x128xf32>
    %36 = arith.addf %1, %0 : f32
    %37 = arith.divf %1, %36 : f32
    %cst_14 = arith.constant 1.562500e-02 : f32
    %38 = vector.broadcast %cst_14 : f32 to vector<1x64x1xf32>
    %39 = vector.broadcast %38 : vector<1x64x1xf32> to vector<1x64x128xf32>
    %40 = arith.mulf %35, %39 : vector<1x64x128xf32>
    %cst_15 = arith.constant dense<0.000000e+00> : vector<1x128xf32>
    %41 = vector.multi_reduction <add>, %40, %cst_15 [1] : vector<1x64x128xf32> to vector<1x128xf32>
    %42 = vector.shape_cast %41 : vector<1x128xf32> to vector<1x1x128xf32>
    %cst_16 = arith.constant 9.99999993E-9 : f32
    %43 = vector.broadcast %cst_16 : f32 to vector<1x1x128xf32>
    %44 = arith.addf %42, %43 : vector<1x1x128xf32>
    %cst_17 = arith.constant 1.562500e-02 : f32
    %45 = vector.broadcast %cst_17 : f32 to vector<1x1x128xf32>
    %46 = arith.divf %45, %44 : vector<1x1x128xf32>
    %47 = vector.broadcast %37 : f32 to vector<1x1x128xf32>
    %48 = math.powf %46, %47 : vector<1x1x128xf32>
    %49 = vector.broadcast %48 : vector<1x1x128xf32> to vector<1x64x128xf32>
    %50 = arith.mulf %35, %49 : vector<1x64x128xf32>
    %cst_18 = arith.constant dense<0.000000e+00> : vector<1x64xf32>
    %51 = vector.multi_reduction <add>, %50, %cst_18 [2] : vector<1x64x128xf32> to vector<1x64xf32>
    %52 = vector.shape_cast %51 : vector<1x64xf32> to vector<1x64x1xf32>
    %cst_19 = arith.constant 9.99999993E-9 : f32
    %53 = vector.broadcast %cst_19 : f32 to vector<1x64x1xf32>
    %54 = arith.addf %52, %53 : vector<1x64x1xf32>
    %cst_20 = arith.constant 1.562500e-02 : f32
    %55 = vector.broadcast %cst_20 : f32 to vector<1x64x1xf32>
    %56 = arith.divf %55, %54 : vector<1x64x1xf32>
    %57 = vector.broadcast %37 : f32 to vector<1x64x1xf32>
    %58 = math.powf %56, %57 : vector<1x64x1xf32>
    %59 = vector.broadcast %58 : vector<1x64x1xf32> to vector<1x64x128xf32>
    %60 = arith.mulf %35, %59 : vector<1x64x128xf32>
    %cst_21 = arith.constant dense<0.000000e+00> : vector<1x128xf32>
    %61 = vector.multi_reduction <add>, %60, %cst_21 [1] : vector<1x64x128xf32> to vector<1x128xf32>
    %62 = vector.shape_cast %61 : vector<1x128xf32> to vector<1x1x128xf32>
    %cst_22 = arith.constant 9.99999993E-9 : f32
    %63 = vector.broadcast %cst_22 : f32 to vector<1x1x128xf32>
    %64 = arith.addf %62, %63 : vector<1x1x128xf32>
    %cst_23 = arith.constant 1.562500e-02 : f32
    %65 = vector.broadcast %cst_23 : f32 to vector<1x1x128xf32>
    %66 = arith.divf %65, %64 : vector<1x1x128xf32>
    %67 = vector.broadcast %37 : f32 to vector<1x1x128xf32>
    %68 = math.powf %66, %67 : vector<1x1x128xf32>
    %69 = vector.broadcast %68 : vector<1x1x128xf32> to vector<1x64x128xf32>
    %70 = arith.mulf %35, %69 : vector<1x64x128xf32>
    %cst_24 = arith.constant dense<0.000000e+00> : vector<1x64xf32>
    %71 = vector.multi_reduction <add>, %70, %cst_24 [2] : vector<1x64x128xf32> to vector<1x64xf32>
    %72 = vector.shape_cast %71 : vector<1x64xf32> to vector<1x64x1xf32>
    %cst_25 = arith.constant 9.99999993E-9 : f32
    %73 = vector.broadcast %cst_25 : f32 to vector<1x64x1xf32>
    %74 = arith.addf %72, %73 : vector<1x64x1xf32>
    %cst_26 = arith.constant 1.562500e-02 : f32
    %75 = vector.broadcast %cst_26 : f32 to vector<1x64x1xf32>
    %76 = arith.divf %75, %74 : vector<1x64x1xf32>
    %77 = vector.broadcast %37 : f32 to vector<1x64x1xf32>
    %78 = math.powf %76, %77 : vector<1x64x1xf32>
    %79 = vector.broadcast %78 : vector<1x64x1xf32> to vector<1x64x128xf32>
    %80 = arith.mulf %35, %79 : vector<1x64x128xf32>
    %cst_27 = arith.constant dense<0.000000e+00> : vector<1x128xf32>
    %81 = vector.multi_reduction <add>, %80, %cst_27 [1] : vector<1x64x128xf32> to vector<1x128xf32>
    %82 = vector.shape_cast %81 : vector<1x128xf32> to vector<1x1x128xf32>
    %cst_28 = arith.constant 9.99999993E-9 : f32
    %83 = vector.broadcast %cst_28 : f32 to vector<1x1x128xf32>
    %84 = arith.addf %82, %83 : vector<1x1x128xf32>
    %cst_29 = arith.constant 1.562500e-02 : f32
    %85 = vector.broadcast %cst_29 : f32 to vector<1x1x128xf32>
    %86 = arith.divf %85, %84 : vector<1x1x128xf32>
    %87 = vector.broadcast %37 : f32 to vector<1x1x128xf32>
    %88 = math.powf %86, %87 : vector<1x1x128xf32>
    %89 = vector.broadcast %88 : vector<1x1x128xf32> to vector<1x64x128xf32>
    %90 = arith.mulf %35, %89 : vector<1x64x128xf32>
    %cst_30 = arith.constant dense<0.000000e+00> : vector<1x64xf32>
    %91 = vector.multi_reduction <add>, %90, %cst_30 [2] : vector<1x64x128xf32> to vector<1x64xf32>
    %92 = vector.shape_cast %91 : vector<1x64xf32> to vector<1x64x1xf32>
    %cst_31 = arith.constant 9.99999993E-9 : f32
    %93 = vector.broadcast %cst_31 : f32 to vector<1x64x1xf32>
    %94 = arith.addf %92, %93 : vector<1x64x1xf32>
    %cst_32 = arith.constant 1.562500e-02 : f32
    %95 = vector.broadcast %cst_32 : f32 to vector<1x64x1xf32>
    %96 = arith.divf %95, %94 : vector<1x64x1xf32>
    %97 = vector.broadcast %37 : f32 to vector<1x64x1xf32>
    %98 = math.powf %96, %97 : vector<1x64x1xf32>
    %99 = vector.broadcast %98 : vector<1x64x1xf32> to vector<1x64x128xf32>
    %100 = arith.mulf %35, %99 : vector<1x64x128xf32>
    %cst_33 = arith.constant dense<0.000000e+00> : vector<1x128xf32>
    %101 = vector.multi_reduction <add>, %100, %cst_33 [1] : vector<1x64x128xf32> to vector<1x128xf32>
    %102 = vector.shape_cast %101 : vector<1x128xf32> to vector<1x1x128xf32>
    %cst_34 = arith.constant 9.99999993E-9 : f32
    %103 = vector.broadcast %cst_34 : f32 to vector<1x1x128xf32>
    %104 = arith.addf %102, %103 : vector<1x1x128xf32>
    %cst_35 = arith.constant 1.562500e-02 : f32
    %105 = vector.broadcast %cst_35 : f32 to vector<1x1x128xf32>
    %106 = arith.divf %105, %104 : vector<1x1x128xf32>
    %107 = vector.broadcast %37 : f32 to vector<1x1x128xf32>
    %108 = math.powf %106, %107 : vector<1x1x128xf32>
    %109 = vector.broadcast %108 : vector<1x1x128xf32> to vector<1x64x128xf32>
    %110 = arith.mulf %35, %109 : vector<1x64x128xf32>
    %cst_36 = arith.constant dense<0.000000e+00> : vector<1x64xf32>
    %111 = vector.multi_reduction <add>, %110, %cst_36 [2] : vector<1x64x128xf32> to vector<1x64xf32>
    %112 = vector.shape_cast %111 : vector<1x64xf32> to vector<1x64x1xf32>
    %cst_37 = arith.constant 9.99999993E-9 : f32
    %113 = vector.broadcast %cst_37 : f32 to vector<1x64x1xf32>
    %114 = arith.addf %112, %113 : vector<1x64x1xf32>
    %cst_38 = arith.constant 1.562500e-02 : f32
    %115 = vector.broadcast %cst_38 : f32 to vector<1x64x1xf32>
    %116 = arith.divf %115, %114 : vector<1x64x1xf32>
    %117 = vector.broadcast %37 : f32 to vector<1x64x1xf32>
    %118 = math.powf %116, %117 : vector<1x64x1xf32>
    %119 = vector.broadcast %118 : vector<1x64x1xf32> to vector<1x64x128xf32>
    %120 = arith.mulf %35, %119 : vector<1x64x128xf32>
    %cst_39 = arith.constant dense<0.000000e+00> : vector<1x128xf32>
    %121 = vector.multi_reduction <add>, %120, %cst_39 [1] : vector<1x64x128xf32> to vector<1x128xf32>
    %122 = vector.shape_cast %121 : vector<1x128xf32> to vector<1x1x128xf32>
    %cst_40 = arith.constant 9.99999993E-9 : f32
    %123 = vector.broadcast %cst_40 : f32 to vector<1x1x128xf32>
    %124 = arith.addf %122, %123 : vector<1x1x128xf32>
    %cst_41 = arith.constant 1.562500e-02 : f32
    %125 = vector.broadcast %cst_41 : f32 to vector<1x1x128xf32>
    %126 = arith.divf %125, %124 : vector<1x1x128xf32>
    %127 = vector.broadcast %37 : f32 to vector<1x1x128xf32>
    %128 = math.powf %126, %127 : vector<1x1x128xf32>
    %129 = vector.broadcast %128 : vector<1x1x128xf32> to vector<1x64x128xf32>
    %130 = arith.mulf %35, %129 : vector<1x64x128xf32>
    %cst_42 = arith.constant dense<0.000000e+00> : vector<1x64xf32>
    %131 = vector.multi_reduction <add>, %130, %cst_42 [2] : vector<1x64x128xf32> to vector<1x64xf32>
    %132 = vector.shape_cast %131 : vector<1x64xf32> to vector<1x64x1xf32>
    %cst_43 = arith.constant 9.99999993E-9 : f32
    %133 = vector.broadcast %cst_43 : f32 to vector<1x64x1xf32>
    %134 = arith.addf %132, %133 : vector<1x64x1xf32>
    %cst_44 = arith.constant 1.562500e-02 : f32
    %135 = vector.broadcast %cst_44 : f32 to vector<1x64x1xf32>
    %136 = arith.divf %135, %134 : vector<1x64x1xf32>
    %137 = vector.broadcast %37 : f32 to vector<1x64x1xf32>
    %138 = math.powf %136, %137 : vector<1x64x1xf32>
    %139 = vector.broadcast %138 : vector<1x64x1xf32> to vector<1x64x128xf32>
    %140 = arith.mulf %139, %35 : vector<1x64x128xf32>
    %141 = vector.broadcast %128 : vector<1x1x128xf32> to vector<1x64x128xf32>
    %142 = arith.mulf %140, %141 : vector<1x64x128xf32>
    %143 = arith.mulf %138, %132 : vector<1x64x1xf32>
    %c0_45 = arith.constant 0 : index
    %c0_46 = arith.constant 0 : index
    %c0_47 = arith.constant 0 : index
    %144 = vector.load %arg6[%c0_45, %c0_46, %c0_47] : memref<1x64x128xf32, #tpu.memory_space<vmem>>, vector<1x64x128xf32>
    tpu.vector_store %arg6[%c0_45, %c0_46, %c0_47], %142 {strides = array<i32>} : memref<1x64x128xf32, #tpu.memory_space<vmem>>, vector<1x64x128xf32>,
    %c0_48 = arith.constant 0 : index
    %c0_49 = arith.constant 0 : index
    %c0_50 = arith.constant 0 : index
    %145 = vector.load %arg5[%c0_48, %c0_49, %c0_50] : memref<1x128x3xf32, #tpu.memory_space<vmem>>, vector<1x128x3xf32>
    "tpu.trace_start"() <{level = 10 : i32, message = "bnm,bmd->bnd"}> : () -> ()
    %cst_51 = arith.constant dense<0.000000e+00> : vector<1x64x3xf32>
    %146 = tpu.matmul %142, %145, %cst_51 {dimension_numbers = #tpu.dot_dimension_numbers<[2], [1], [1], [2], [0, 0, 0, 1, 1, 2], [0], [0]>} : vector<1x64x128xf32>, vector<1x128x3xf32>, vector<1x64x3xf32> -> vector<1x64x3xf32>
    "tpu.trace_stop"() : () -> ()
    %cst_52 = arith.constant 9.99999993E-9 : f32
    %147 = vector.broadcast %cst_52 : f32 to vector<1x64x1xf32>
    %148 = arith.addf %143, %147 : vector<1x64x1xf32>
    %149 = vector.broadcast %148 : vector<1x64x1xf32> to vector<1x64x3xf32>
    %150 = arith.divf %146, %149 : vector<1x64x3xf32>
    %151 = tpu.concatenate %143, %150 in 2 : vector<1x64x1xf32>, vector<1x64x3xf32> -> vector<1x64x4xf32>
    %c0_53 = arith.constant 0 : index
    %c0_54 = arith.constant 0 : index
    %c0_55 = arith.constant 0 : index
    %152 = vector.load %arg7[%c0_53, %c0_54, %c0_55] : memref<1x64x4xf32, #tpu.memory_space<vmem>>, vector<1x64x4xf32>
    tpu.vector_store %arg7[%c0_53, %c0_54, %c0_55], %151 {strides = array<i32>} : memref<1x64x4xf32, #tpu.memory_space<vmem>>, vector<1x64x4xf32>,
    return
  }
  func.func @transform_0(%arg0: i32) -> i32 {
    %c0_i32 = arith.constant 0 : i32
    %c0_i32_0 = arith.constant 0 : i32
    return %c0_i32 : i32
  }
  func.func @transform_1(%arg0: i32) -> i32 {
    %c0_i32 = arith.constant 0 : i32
    %c0_i32_0 = arith.constant 0 : i32
    return %c0_i32 : i32
  }
  func.func @transform_2(%arg0: i32) -> (i32, i32, i32) {
    %c0_i32 = arith.constant 0 : i32
    %c0_i32_0 = arith.constant 0 : i32
    %c0_i32_1 = arith.constant 0 : i32
    return %arg0, %c0_i32, %c0_i32_0 : i32, i32, i32
  }
  func.func @transform_3(%arg0: i32) -> (i32, i32, i32) {
    %c0_i32 = arith.constant 0 : i32
    %c0_i32_0 = arith.constant 0 : i32
    %c0_i32_1 = arith.constant 0 : i32
    return %arg0, %c0_i32, %c0_i32_0 : i32, i32, i32
  }
  func.func @transform_4(%arg0: i32) -> (i32, i32, i32) {
    %c0_i32 = arith.constant 0 : i32
    %c0_i32_0 = arith.constant 0 : i32
    %c0_i32_1 = arith.constant 0 : i32
    return %arg0, %c0_i32, %c0_i32_0 : i32, i32, i32
  }
  func.func @transform_5(%arg0: i32) -> (i32, i32, i32) {
    %c0_i32 = arith.constant 0 : i32
    %c0_i32_0 = arith.constant 0 : i32
    %c0_i32_1 = arith.constant 0 : i32
    return %arg0, %c0_i32, %c0_i32_0 : i32, i32, i32
  }
  func.func @transform_6(%arg0: i32) -> (i32, i32, i32) {
    %c0_i32 = arith.constant 0 : i32
    %c0_i32_0 = arith.constant 0 : i32
    %c0_i32_1 = arith.constant 0 : i32
    return %arg0, %c0_i32, %c0_i32_0 : i32, i32, i32
  }
}

</mosaic_0001>

<llo_original>
// kernel: tpu_custom_call.1
$region0: #{tpu_custom_call.1}
  #allocation0 [shape = 'u32[]', space=smem, size = 0x4, offset = 0x4, fixed_abs, tag = 'smem constant byte address 0x4 - core index']
  #allocation1 [shape = 'u32[144,128]{1,0:T(1,128)}', space=vmem, size = 0x12000, scoped, tag = 'internal scratch']
  #allocation2 [shape = 'f32[1]{0:T(128)S(6)}', space=smem, size = 0x200, scoped, tag = 'scoped memory for tpu_custom_call.1']
  #allocation3 [shape = 'f32[1]{0:T(128)S(6)}', space=smem, size = 0x200, scoped, tag = 'scoped memory for tpu_custom_call.1']
  %s0 = inlined_call_operand.<no memory space> [shape: f32[1], index: 0, kind: input, shape index: {}]
  %s1 = inlined_call_operand.<no memory space> [shape: f32[1], index: 1, kind: input, shape index: {}]
  %s2 = inlined_call_operand.vmem [shape: f32[2,64,32], index: 2, kind: input, shape index: {}]
  %s3 = inlined_call_operand.vmem [shape: f32[2,128,32], index: 3, kind: input, shape index: {}]
  %s4 = inlined_call_operand.vmem [shape: f32[2,128,3], index: 4, kind: input, shape index: {}]
  %s5 = inlined_call_operand.hbm [shape: f32[2,64,128], index: 5, kind: output, shape index: {0}]
  %s6 = inlined_call_operand.vmem [shape: f32[2,64,4], index: 6, kind: output, shape index: {1}]
  %7 = xla_tuple %s5, %s6
  %s8 = sld [smem:[#allocation0]]
  $region61: #{tpu_custom_call.1} parent=0
    _
  %s10 = ssub.s32 1, %s8
  %s11 = scalar_select 0, %s10, %s8
  %12 = sst [smem:[#allocation2]] %s0
  %13 = sst [smem:[#allocation3]] %s1
  $region1: #{tpu_custom_call.1} parent=0
    #allocation4 [shape = 'u8[65536]{0}', space=vmem, size = 0x10000, scoped, tag = 'output window, operand 0']
    #allocation5 [shape = 's32[2]{0}', space=sflag, size = 0x8, scoped, tag = 'scoped memory for tpu_custom_call.1']
    %14 = vsyncpa [#allocation5], 0
    %s15 = scalar_lea.sflag [#allocation5], 1
    %16 = vsyncpa %s15, 0
    loop: start=0, step=1, limit=4
    $region2: #{tpu_custom_call.1} parent=1 // loop_pre_header
      _
    $region3: #{tpu_custom_call.1} parent=1 // loop_header
      %s18 = sphi 0, %s22
      %p19 = scmp.ge.s32.totalorder %s18, 4
      %s26 = sphi 0, %s26
      %s28 = sphi 0, %s26
      %s29 = sphi 0, %s28
      %s43 = sphi 0, %s29
      %s47 = sphi 0, %s47
      %s49 = sphi 0, %s47
      %s50 = sphi 0, %s49
      %s64 = sphi 0, %s50
      %s70 = sphi 0, %s72
      %s73 = sphi 0, %s70
      %s74 = sphi 0, %s73
      %s90 = sphi 0, %s74
      %s96 = sphi 0, %s98
      %s99 = sphi 0, %s96
      %s100 = sphi 0, %s99
      %s116 = sphi 0, %s100
      %s122 = sphi 0, %s124
      %s125 = sphi 0, %s122
      %s126 = sphi 0, %s125
      %s142 = sphi 0, %s126
      %s148 = sphi 0, %s150
      %s151 = sphi 0, %s148
      %s152 = sphi 0, %s151
      %s168 = sphi 0, %s152
      %s174 = sphi 0, %s176
      %s177 = sphi 0, %s174
      %s178 = sphi 0, %s177
      %s194 = sphi 0, %s178
    $region4: #{tpu_custom_call.1} parent=1 // loop_header_branch
      %21 = sbr.rel (%p19) target = $region8
    $region5: #{tpu_custom_call.1} parent=1 // loop_body
      %s23 = ssub.s32 %s18, 1
      %s24 = ssub.s32 %s18, 2
      %s25 = sadd.s32 %s18, 1
      %s27 = sadd.s32 %s26, 1
      %p30 = scmp.eq.s32.totalorder %s18, 1
      %p31 = scmp.ne.s32.totalorder %s26, %s28
      %p32 = scmp.eq.s32.totalorder %s18, 0
      %p33 = por %p31, %p32
      %p34 = scmp.ne.s32.totalorder %s26, %s28
      %p35 = scmp.eq.s32.totalorder %s23, 1
      %p36 = por %p34, %p35
      %p37 = scmp.ne.s32.totalorder %s28, %s29
      %p38 = scmp.eq.s32.totalorder %s23, 0
      %p39 = por %p37, %p38
      %p40 = scmp.ne.s32.totalorder %s28, %s29
      %p41 = scmp.eq.s32.totalorder %s24, 1
      %p42 = por %p40, %p41
      %p44 = scmp.ne.s32.totalorder %s29, %s43
      %p45 = scmp.eq.s32.totalorder %s24, 0
      %p46 = por %p44, %p45
      %s48 = sadd.s32 %s47, 1
      %p51 = scmp.eq.s32.totalorder %s18, 1
      %p52 = scmp.ne.s32.totalorder %s47, %s49
      %p53 = scmp.eq.s32.totalorder %s18, 0
      %p54 = por %p52, %p53
      %p55 = scmp.ne.s32.totalorder %s47, %s49
      %p56 = scmp.eq.s32.totalorder %s23, 1
      %p57 = por %p55, %p56
      %p58 = scmp.ne.s32.totalorder %s49, %s50
      %p59 = scmp.eq.s32.totalorder %s23, 0
      %p60 = por %p58, %p59
      %p61 = scmp.ne.s32.totalorder %s49, %s50
      %p62 = scmp.eq.s32.totalorder %s24, 1
      %p63 = por %p61, %p62
      %p65 = scmp.ne.s32.totalorder %s50, %s64
      %p66 = scmp.eq.s32.totalorder %s24, 0
      %p67 = por %p65, %p66
      %s68 = ssub.s32 %s18, %s25
      %p69 = scmp.eq.s32.totalorder %s68, 0
      %s71 = sadd.s32 %s70, 1
      %s72 = scalar_select %p69, %s70, %s71
      %p75 = pneg %p69
      %p76 = scmp.eq.s32.totalorder %s18, 1
      %p77 = por %p75, %p76
      %p78 = scmp.ne.s32.totalorder %s70, %s73
      %p79 = scmp.eq.s32.totalorder %s18, 0
      %p80 = por %p78, %p79
      %p81 = scmp.ne.s32.totalorder %s70, %s73
      %p82 = scmp.eq.s32.totalorder %s23, 1
      %p83 = por %p81, %p82
      %p84 = scmp.ne.s32.totalorder %s73, %s74
      %p85 = scmp.eq.s32.totalorder %s23, 0
      %p86 = por %p84, %p85
      %p87 = scmp.ne.s32.totalorder %s73, %s74
      %p88 = scmp.eq.s32.totalorder %s24, 1
      %p89 = por %p87, %p88
      %p91 = scmp.ne.s32.totalorder %s74, %s90
      %p92 = scmp.eq.s32.totalorder %s24, 0
      %p93 = por %p91, %p92
      %s94 = ssub.s32 %s18, %s25
      %p95 = scmp.eq.s32.totalorder %s94, 0
      %s97 = sadd.s32 %s96, 1
      %s98 = scalar_select %p95, %s96, %s97
      %p101 = pneg %p95
      %p102 = scmp.eq.s32.totalorder %s18, 1
      %p103 = por %p101, %p102
      %p104 = scmp.ne.s32.totalorder %s96, %s99
      %p105 = scmp.eq.s32.totalorder %s18, 0
      %p106 = por %p104, %p105
      %p107 = scmp.ne.s32.totalorder %s96, %s99
      %p108 = scmp.eq.s32.totalorder %s23, 1
      %p109 = por %p107, %p108
      %p110 = scmp.ne.s32.totalorder %s99, %s100
      %p111 = scmp.eq.s32.totalorder %s23, 0
      %p112 = por %p110, %p111
      %p113 = scmp.ne.s32.totalorder %s99, %s100
      %p114 = scmp.eq.s32.totalorder %s24, 1
      %p115 = por %p113, %p114
      %p117 = scmp.ne.s32.totalorder %s100, %s116
      %p118 = scmp.eq.s32.totalorder %s24, 0
      %p119 = por %p117, %p118
      %s120 = ssub.s32 %s18, %s25
      %p121 = scmp.eq.s32.totalorder %s120, 0
      %s123 = sadd.s32 %s122, 1
      %s124 = scalar_select %p121, %s122, %s123
      %p127 = pneg %p121
      %p128 = scmp.eq.s32.totalorder %s18, 1
      %p129 = por %p127, %p128
      %p130 = scmp.ne.s32.totalorder %s122, %s125
      %p131 = scmp.eq.s32.totalorder %s18, 0
      %p132 = por %p130, %p131
      %p133 = scmp.ne.s32.totalorder %s122, %s125
      %p134 = scmp.eq.s32.totalorder %s23, 1
      %p135 = por %p133, %p134
      %p136 = scmp.ne.s32.totalorder %s125, %s126
      %p137 = scmp.eq.s32.totalorder %s23, 0
      %p138 = por %p136, %p137
      %p139 = scmp.ne.s32.totalorder %s125, %s126
      %p140 = scmp.eq.s32.totalorder %s24, 1
      %p141 = por %p139, %p140
      %p143 = scmp.ne.s32.totalorder %s126, %s142
      %p144 = scmp.eq.s32.totalorder %s24, 0
      %p145 = por %p143, %p144
      %s146 = ssub.s32 %s18, %s25
      %p147 = scmp.eq.s32.totalorder %s146, 0
      %s149 = sadd.s32 %s148, 1
      %s150 = scalar_select %p147, %s148, %s149
      %p153 = pneg %p147
      %p154 = scmp.eq.s32.totalorder %s18, 1
      %p155 = por %p153, %p154
      %p156 = scmp.ne.s32.totalorder %s148, %s151
      %p157 = scmp.eq.s32.totalorder %s18, 0
      %p158 = por %p156, %p157
      %p159 = scmp.ne.s32.totalorder %s148, %s151
      %p160 = scmp.eq.s32.totalorder %s23, 1
      %p161 = por %p159, %p160
      %p162 = scmp.ne.s32.totalorder %s151, %s152
      %p163 = scmp.eq.s32.totalorder %s23, 0
      %p164 = por %p162, %p163
      %p165 = scmp.ne.s32.totalorder %s151, %s152
      %p166 = scmp.eq.s32.totalorder %s24, 1
      %p167 = por %p165, %p166
      %p169 = scmp.ne.s32.totalorder %s152, %s168
      %p170 = scmp.eq.s32.totalorder %s24, 0
      %p171 = por %p169, %p170
      %s172 = ssub.s32 %s18, %s25
      %p173 = scmp.eq.s32.totalorder %s172, 0
      %s175 = sadd.s32 %s174, 1
      %s176 = scalar_select %p173, %s174, %s175
      %p179 = pneg %p173
      %p180 = scmp.eq.s32.totalorder %s18, 1
      %p181 = por %p179, %p180
      %p182 = scmp.ne.s32.totalorder %s174, %s177
      %p183 = scmp.eq.s32.totalorder %s18, 0
      %p184 = por %p182, %p183
      %p185 = scmp.ne.s32.totalorder %s174, %s177
      %p186 = scmp.eq.s32.totalorder %s23, 1
      %p187 = por %p185, %p186
      %p188 = scmp.ne.s32.totalorder %s177, %s178
      %p189 = scmp.eq.s32.totalorder %s23, 0
      %p190 = por %p188, %p189
      %p191 = scmp.ne.s32.totalorder %s177, %s178
      %p192 = scmp.eq.s32.totalorder %s24, 1
      %p193 = por %p191, %p192
      %p195 = scmp.ne.s32.totalorder %s178, %s194
      %p196 = scmp.eq.s32.totalorder %s24, 0
      %p197 = por %p195, %p196
      %p198 = scmp.le.s32.totalorder 1, %s18
      %p199 = scmp.lt.s32.totalorder %s18, 3
      %p200 = pnand %p198, %p199
      %p201 = pneg %p200
      // Predicated region
      $region9: #{tpu_custom_call.1} parent=5 // pred_check
        _
      $region10: #{tpu_custom_call.1} parent=5 // pred_check_branch
        %203 = sbr.rel (%p200) target = $region12
      $region11: #{tpu_custom_call.1} parent=5 // pred_region
        %s204 = ssub.s32 %s18, 1
        // Predicated region
        $region13: #{tpu_custom_call.1} parent=11 // pred_check
          %p205 = pneg %p39
        $region14: #{tpu_custom_call.1} parent=11 // pred_check_branch
          %207 = sbr.rel (%p205) target = $region16
        $region15: #{tpu_custom_call.1} parent=11 // pred_region
          _
        $region16: #{tpu_custom_call.1} parent=11 // pred_fallthru
          _
        // Predicated region
        $region17: #{tpu_custom_call.1} parent=11 // pred_check
          %p208 = pneg %p60
        $region18: #{tpu_custom_call.1} parent=11 // pred_check_branch
          %210 = sbr.rel (%p208) target = $region20
        $region19: #{tpu_custom_call.1} parent=11 // pred_region
          _
        $region20: #{tpu_custom_call.1} parent=11 // pred_fallthru
          _
      $region12: #{tpu_custom_call.1} parent=5 // pred_fallthru
        _
      %p211 = scmp.lt.s32.totalorder %s18, 2
      // Predicated region
      $region21: #{tpu_custom_call.1} parent=5 // pred_check
        %p212 = pneg %p211
      $region22: #{tpu_custom_call.1} parent=5 // pred_check_branch
        %214 = sbr.rel (%p212) target = $region24
      $region23: #{tpu_custom_call.1} parent=5 // pred_region
        // Predicated region
        $region25: #{tpu_custom_call.1} parent=23 // pred_check
          %p215 = pneg %p80
        $region26: #{tpu_custom_call.1} parent=23 // pred_check_branch
          %217 = sbr.rel (%p215) target = $region28
        $region27: #{tpu_custom_call.1} parent=23 // pred_region
          %p218 = scmp.lt.s32.totalorder %s18, 1
          %s219 = scalar_select %p218, %s18, 1
          %s220 = smul.addr %s219, 8
          %s221 = smul.addr %s220, 8
          %s222 = scalar_lea.vmem %s2, %s221
        $region28: #{tpu_custom_call.1} parent=23 // pred_fallthru
          _
        // Predicated region
        $region29: #{tpu_custom_call.1} parent=23 // pred_check
          %p223 = pneg %p106
        $region30: #{tpu_custom_call.1} parent=23 // pred_check_branch
          %225 = sbr.rel (%p223) target = $region32
        $region31: #{tpu_custom_call.1} parent=23 // pred_region
          %p226 = scmp.lt.s32.totalorder %s18, 1
          %s227 = scalar_select %p226, %s18, 1
          %s228 = smul.addr %s227, 16
          %s229 = smul.addr %s228, 8
          %s230 = scalar_lea.vmem %s3, %s229
        $region32: #{tpu_custom_call.1} parent=23 // pred_fallthru
          _
        // Predicated region
        $region33: #{tpu_custom_call.1} parent=23 // pred_check
          %p231 = pneg %p132
        $region34: #{tpu_custom_call.1} parent=23 // pred_check_branch
          %233 = sbr.rel (%p231) target = $region36
        $region35: #{tpu_custom_call.1} parent=23 // pred_region
          %p234 = scmp.lt.s32.totalorder %s18, 1
          %s235 = scalar_select %p234, %s18, 1
          %s236 = smul.addr %s235, 16
          %s237 = smul.addr %s236, 8
          %s238 = scalar_lea.vmem %s4, %s237
        $region36: #{tpu_custom_call.1} parent=23 // pred_fallthru
          _
      $region24: #{tpu_custom_call.1} parent=5 // pred_fallthru
        _
      %p239 = scmp.le.s32.totalorder 1, %s18
      %p240 = scmp.lt.s32.totalorder %s18, 3
      %p241 = pnand %p239, %p240
      %p242 = pneg %p241
      // Predicated region
      $region37: #{tpu_custom_call.1} parent=5 // pred_check
        _
      $region38: #{tpu_custom_call.1} parent=5 // pred_check_branch
        %244 = sbr.rel (%p241) target = $region40
      $region39: #{tpu_custom_call.1} parent=5 // pred_region
        %s245 = ssub.s32 %s18, 1
        %p246 = pneg %p39
        %p247 = pneg %p36
        %p248 = pneg %p60
        %p249 = pneg %p57
        %p250 = scmp.lt.s32.totalorder %s23, 1
        %s251 = scalar_select %p250, %s23, 1
        %s252 = smul.addr %s251, 8
        %s253 = smul.addr %s252, 8
        %s254 = scalar_lea.vmem %s2, %s253
        %p255 = pneg %p86
        %p256 = pneg %p83
        %p257 = scmp.lt.s32.totalorder %s23, 1
        %s258 = scalar_select %p257, %s23, 1
        %s259 = smul.addr %s258, 16
        %s260 = smul.addr %s259, 8
        %s261 = scalar_lea.vmem %s3, %s260
        %p262 = pneg %p112
        %p263 = pneg %p109
        %p264 = scmp.lt.s32.totalorder %s23, 1
        %s265 = scalar_select %p264, %s23, 1
        %s266 = smul.addr %s265, 16
        %s267 = smul.addr %s266, 8
        %s268 = scalar_lea.vmem %s4, %s267
        %p269 = pneg %p138
        %p270 = pneg %p135
        %p271 = pneg %p164
        %p272 = pneg %p161
        %s273 = sand.u32 %s151, 1
        %s274 = scalar_lea.sflag [#allocation5], %s273
        %s275 = sand.u32 %s151, 1
        %s276 = smul.addr %s275, 64
        %s277 = scalar_lea.vmem [#allocation4], %s276
        %p278 = pneg %p190
        %p279 = pneg %p187
        %p280 = scmp.lt.s32.totalorder %s23, 1
        %s281 = scalar_select %p280, %s23, 1
        %s282 = smul.addr %s281, 8
        %s283 = smul.addr %s282, 8
        %s284 = scalar_lea.vmem %s6, %s283
        %p285 = scmp.lt.s32.totalorder %s23, 1
        %s286 = scalar_select %p285, %s23, 1
        %s287 = smul.addr %s286, 8
        %s288 = smul.addr %s287, 8
        %s289 = scalar_lea.vmem %s2, %s288
        %p290 = scmp.lt.s32.totalorder %s23, 1
        %s291 = scalar_select %p290, %s23, 1
        %s292 = smul.addr %s291, 16
        %s293 = smul.addr %s292, 8
        %s294 = scalar_lea.vmem %s3, %s293
        %p295 = scmp.lt.s32.totalorder %s23, 1
        %s296 = scalar_select %p295, %s23, 1
        %s297 = smul.addr %s296, 16
        %s298 = smul.addr %s297, 8
        %s299 = scalar_lea.vmem %s4, %s298
        %p300 = scmp.lt.s32.totalorder %s23, 1
        %s301 = scalar_select %p300, %s23, 1
        %s302 = smul.addr %s301, 8
        %s303 = smul.addr %s302, 8
        %s304 = scalar_lea.vmem %s6, %s303
        %s305 = sld [smem:[#allocation2]]
        %s306 = sld [smem:[#allocation3]]
        %v307 = vld [vmem:[%s289] sm:$0xff]
        %v308 = vld [vmem:[%s289 + $0x8] sm:$0xff]
        %v309 = vld [vmem:[%s289 + $0x10] sm:$0xff]
        %v310 = vld [vmem:[%s289 + $0x18] sm:$0xff]
        %v311 = vld [vmem:[%s289 + $0x20] sm:$0xff]
        %v312 = vld [vmem:[%s289 + $0x28] sm:$0xff]
        %v313 = vld [vmem:[%s289 + $0x30] sm:$0xff]
        %v314 = vld [vmem:[%s289 + $0x38] sm:$0xff]
        %v315 = vld [vmem:[%s294] sm:$0xff]
        %v316 = vld [vmem:[%s294 + $0x8] sm:$0xff]
        %v317 = vld [vmem:[%s294 + $0x10] sm:$0xff]
        %v318 = vld [vmem:[%s294 + $0x18] sm:$0xff]
        %v319 = vld [vmem:[%s294 + $0x20] sm:$0xff]
        %v320 = vld [vmem:[%s294 + $0x28] sm:$0xff]
        %v321 = vld [vmem:[%s294 + $0x30] sm:$0xff]
        %v322 = vld [vmem:[%s294 + $0x38] sm:$0xff]
        %v323 = vld [vmem:[%s294 + $0x40] sm:$0xff]
        %v324 = vld [vmem:[%s294 + $0x48] sm:$0xff]
        %v325 = vld [vmem:[%s294 + $0x50] sm:$0xff]
        %v326 = vld [vmem:[%s294 + $0x58] sm:$0xff]
        %v327 = vld [vmem:[%s294 + $0x60] sm:$0xff]
        %v328 = vld [vmem:[%s294 + $0x68] sm:$0xff]
        %v329 = vld [vmem:[%s294 + $0x70] sm:$0xff]
        %v330 = vld [vmem:[%s294 + $0x78] sm:$0xff]
        %v331 = vmul.f32 %v307, %v307
        %v332 = vmul.f32 %v308, %v308
        %v333 = vmul.f32 %v309, %v309
        %v334 = vmul.f32 %v310, %v310
        %v335 = vmul.f32 %v311, %v311
        %v336 = vmul.f32 %v312, %v312
        %v337 = vmul.f32 %v313, %v313
        %v338 = vmul.f32 %v314, %v314
        %vm339 = vcmask 261120
        %v340 = vsel %vm339, %v331, 0.0
        %341 = vadd.xlane.f32.xlu0 %v340
        %v342 = vpop.xlane.xlu0 %341
        %v343 = vsel %vm339, %v332, 0.0
        %344 = vadd.xlane.f32.xlu0 %v343
        %v345 = vpop.xlane.xlu0 %344
        %v346 = vsel %vm339, %v333, 0.0
        %347 = vadd.xlane.f32.xlu0 %v346
        %v348 = vpop.xlane.xlu0 %347
        %v349 = vsel %vm339, %v334, 0.0
        %350 = vadd.xlane.f32.xlu0 %v349
        %v351 = vpop.xlane.xlu0 %350
        %v352 = vsel %vm339, %v335, 0.0
        %353 = vadd.xlane.f32.xlu0 %v352
        %v354 = vpop.xlane.xlu0 %353
        %v355 = vsel %vm339, %v336, 0.0
        %356 = vadd.xlane.f32.xlu0 %v355
        %v357 = vpop.xlane.xlu0 %356
        %v358 = vsel %vm339, %v337, 0.0
        %359 = vadd.xlane.f32.xlu0 %v358
        %v360 = vpop.xlane.xlu0 %359
        %v361 = vsel %vm339, %v338, 0.0
        %362 = vadd.xlane.f32.xlu0 %v361
        %v363 = vpop.xlane.xlu0 %362
        %v364 = vadd.f32 %v342, 1e-08
        %v365 = vadd.f32 %v345, 1e-08
        %v366 = vadd.f32 %v348, 1e-08
        %v367 = vadd.f32 %v351, 1e-08
        %v368 = vadd.f32 %v354, 1e-08
        %v369 = vadd.f32 %v357, 1e-08
        %v370 = vadd.f32 %v360, 1e-08
        %v371 = vadd.f32 %v363, 1e-08
        %v372 = vrsqrt.pop %v364
        %v373 = vrsqrt.pop %v365
        %v374 = vrsqrt.pop %v366
        %v375 = vrsqrt.pop %v367
        %v376 = vrsqrt.pop %v368
        %v377 = vrsqrt.pop %v369
        %v378 = vrsqrt.pop %v370
        %v379 = vrsqrt.pop %v371
        %v380 = vmul.f32 %v307, %v372
        %v381 = vmul.f32 %v308, %v373
        %v382 = vmul.f32 %v309, %v374
        %v383 = vmul.f32 %v310, %v375
        %v384 = vmul.f32 %v311, %v376
        %v385 = vmul.f32 %v312, %v377
        %v386 = vmul.f32 %v313, %v378
        %v387 = vmul.f32 %v314, %v379
        %v388 = vmul.f32 %v315, %v315
        %v389 = vmul.f32 %v316, %v316
        %v390 = vmul.f32 %v317, %v317
        %v391 = vmul.f32 %v318, %v318
        %v392 = vmul.f32 %v319, %v319
        %v393 = vmul.f32 %v320, %v320
        %v394 = vmul.f32 %v321, %v321
        %v395 = vmul.f32 %v322, %v322
        %v396 = vmul.f32 %v323, %v323
        %v397 = vmul.f32 %v324, %v324
        %v398 = vmul.f32 %v325, %v325
        %v399 = vmul.f32 %v326, %v326
        %v400 = vmul.f32 %v327, %v327
        %v401 = vmul.f32 %v328, %v328
        %v402 = vmul.f32 %v329, %v329
        %v403 = vmul.f32 %v330, %v330
        %v404 = vsel %vm339, %v388, 0.0
        %405 = vadd.xlane.f32.xlu0 %v404
        %v406 = vpop.xlane.xlu0 %405
        %v407 = vsel %vm339, %v389, 0.0
        %408 = vadd.xlane.f32.xlu0 %v407
        %v409 = vpop.xlane.xlu0 %408
        %v410 = vsel %vm339, %v390, 0.0
        %411 = vadd.xlane.f32.xlu0 %v410
        %v412 = vpop.xlane.xlu0 %411
        %v413 = vsel %vm339, %v391, 0.0
        %414 = vadd.xlane.f32.xlu0 %v413
        %v415 = vpop.xlane.xlu0 %414
        %v416 = vsel %vm339, %v392, 0.0
        %417 = vadd.xlane.f32.xlu0 %v416
        %v418 = vpop.xlane.xlu0 %417
        %v419 = vsel %vm339, %v393, 0.0
        %420 = vadd.xlane.f32.xlu0 %v419
        %v421 = vpop.xlane.xlu0 %420
        %v422 = vsel %vm339, %v394, 0.0
        %423 = vadd.xlane.f32.xlu0 %v422
        %v424 = vpop.xlane.xlu0 %423
        %v425 = vsel %vm339, %v395, 0.0
        %426 = vadd.xlane.f32.xlu0 %v425
        %v427 = vpop.xlane.xlu0 %426
        %v428 = vsel %vm339, %v396, 0.0
        %429 = vadd.xlane.f32.xlu0 %v428
        %v430 = vpop.xlane.xlu0 %429
        %v431 = vsel %vm339, %v397, 0.0
        %432 = vadd.xlane.f32.xlu0 %v431
        %v433 = vpop.xlane.xlu0 %432
        %v434 = vsel %vm339, %v398, 0.0
        %435 = vadd.xlane.f32.xlu0 %v434
        %v436 = vpop.xlane.xlu0 %435
        %v437 = vsel %vm339, %v399, 0.0
        %438 = vadd.xlane.f32.xlu0 %v437
        %v439 = vpop.xlane.xlu0 %438
        %v440 = vsel %vm339, %v400, 0.0
        %441 = vadd.xlane.f32.xlu0 %v440
        %v442 = vpop.xlane.xlu0 %441
        %v443 = vsel %vm339, %v401, 0.0
        %444 = vadd.xlane.f32.xlu0 %v443
        %v445 = vpop.xlane.xlu0 %444
        %v446 = vsel %vm339, %v402, 0.0
        %447 = vadd.xlane.f32.xlu0 %v446
        %v448 = vpop.xlane.xlu0 %447
        %v449 = vsel %vm339, %v403, 0.0
        %450 = vadd.xlane.f32.xlu0 %v449
        %v451 = vpop.xlane.xlu0 %450
        %v452 = vadd.f32 %v406, 1e-08
        %v453 = vadd.f32 %v409, 1e-08
        %v454 = vadd.f32 %v412, 1e-08
        %v455 = vadd.f32 %v415, 1e-08
        %v456 = vadd.f32 %v418, 1e-08
        %v457 = vadd.f32 %v421, 1e-08
        %v458 = vadd.f32 %v424, 1e-08
        %v459 = vadd.f32 %v427, 1e-08
        %v460 = vadd.f32 %v430, 1e-08
        %v461 = vadd.f32 %v433, 1e-08
        %v462 = vadd.f32 %v436, 1e-08
        %v463 = vadd.f32 %v439, 1e-08
        %v464 = vadd.f32 %v442, 1e-08
        %v465 = vadd.f32 %v445, 1e-08
        %v466 = vadd.f32 %v448, 1e-08
        %v467 = vadd.f32 %v451, 1e-08
        %v468 = vrsqrt.pop %v452
        %v469 = vrsqrt.pop %v453
        %v470 = vrsqrt.pop %v454
        %v471 = vrsqrt.pop %v455
        %v472 = vrsqrt.pop %v456
        %v473 = vrsqrt.pop %v457
        %v474 = vrsqrt.pop %v458
        %v475 = vrsqrt.pop %v459
        %v476 = vrsqrt.pop %v460
        %v477 = vrsqrt.pop %v461
        %v478 = vrsqrt.pop %v462
        %v479 = vrsqrt.pop %v463
        %v480 = vrsqrt.pop %v464
        %v481 = vrsqrt.pop %v465
        %v482 = vrsqrt.pop %v466
        %v483 = vrsqrt.pop %v467
        %v484 = vmul.f32 %v315, %v468
        %v485 = vmul.f32 %v316, %v469
        %v486 = vmul.f32 %v317, %v470
        %v487 = vmul.f32 %v318, %v471
        %v488 = vmul.f32 %v319, %v472
        %v489 = vmul.f32 %v320, %v473
        %v490 = vmul.f32 %v321, %v474
        %v491 = vmul.f32 %v322, %v475
        %v492 = vmul.f32 %v323, %v476
        %v493 = vmul.f32 %v324, %v477
        %v494 = vmul.f32 %v325, %v478
        %v495 = vmul.f32 %v326, %v479
        %v496 = vmul.f32 %v327, %v480
        %v497 = vmul.f32 %v328, %v481
        %v498 = vmul.f32 %v329, %v482
        %v499 = vmul.f32 %v330, %v483
        %v501 = vsel %vm339, %v380, 0
        %v504 = vsel %vm339, %v381, 0
        %v507 = vsel %vm339, %v382, 0
        %v510 = vsel %vm339, %v383, 0
        %v513 = vsel %vm339, %v384, 0
        %v516 = vsel %vm339, %v385, 0
        %v519 = vsel %vm339, %v386, 0
        %v522 = vsel %vm339, %v387, 0
        %v525 = vsel %vm339, %v484, 0
        %v528 = vsel %vm339, %v485, 0
        %v531 = vsel %vm339, %v486, 0
        %v534 = vsel %vm339, %v487, 0
        %v537 = vsel %vm339, %v488, 0
        %v540 = vsel %vm339, %v489, 0
        %v543 = vsel %vm339, %v490, 0
        %v546 = vsel %vm339, %v491, 0
        %v549 = vsel %vm339, %v492, 0
        %v552 = vsel %vm339, %v493, 0
        %v555 = vsel %vm339, %v494, 0
        %v558 = vsel %vm339, %v495, 0
        %v561 = vsel %vm339, %v496, 0
        %v564 = vsel %vm339, %v497, 0
        %v567 = vsel %vm339, %v498, 0
        %v570 = vsel %vm339, %v499, 0
        %572 = vmatprep.subr.mxu0 0.0
        %573 = vmatpush1.xpose.msra.mxu0 %v525
        %574 = vmatprep.subr.mxu0 0.0
        %575 = vmatpush1.xpose.msra.mxu0 %v528
        %576 = vmatprep.subr.mxu0 0.0
        %577 = vmatpush1.xpose.msra.mxu0 %v531
        %578 = vmatprep.subr.mxu0 0.0
        %579 = vmatpush1.xpose.msra.mxu0 %v534
        %580 = vmatprep.subr.mxu0 0.0
        %581 = vmatpush1.xpose.msra.mxu0 %v537
        %582 = vmatprep.subr.mxu0 0.0
        %583 = vmatpush1.xpose.msra.mxu0 %v540
        %584 = vmatprep.subr.mxu0 0.0
        %585 = vmatpush1.xpose.msra.mxu0 %v543
        %586 = vmatprep.subr.mxu0 0.0
        %587 = vmatpush1.xpose.msra.mxu0 %v546
        %588 = vmatprep.subr.mxu0 0.0
        %589 = vmatpush1.xpose.msra.mxu0 %v549
        %590 = vmatprep.subr.mxu0 0.0
        %591 = vmatpush1.xpose.msra.mxu0 %v552
        %592 = vmatprep.subr.mxu0 0.0
        %593 = vmatpush1.xpose.msra.mxu0 %v555
        %594 = vmatprep.subr.mxu0 0.0
        %595 = vmatpush1.xpose.msra.mxu0 %v558
        %596 = vmatprep.subr.mxu0 0.0
        %597 = vmatpush1.xpose.msra.mxu0 %v561
        %598 = vmatprep.subr.mxu0 0.0
        %599 = vmatpush1.xpose.msra.mxu0 %v564
        %600 = vmatprep.subr.mxu0 0.0
        %601 = vmatpush1.xpose.msra.mxu0 %v567
        %602 = vmatprep.subr.mxu0 0.0
        %603 = vmatpush1.xpose.msra.mxu0 %v570
        %604 = vmatprep.subr.mxu0 0.0
        %605 = vmatpush1.xpose.msra.mxu0 0.0
        %606 = vmatprep.subr.mxu0 0.0
        %607 = vmatpush1.xpose.msra.mxu0 0.0
        %608 = vmatprep.subr.mxu0 0.0
        %609 = vmatpush1.xpose.msra.mxu0 0.0
        %610 = vmatprep.subr.mxu0 0.0
        %611 = vmatpush1.xpose.msra.mxu0 0.0
        %612 = vmatprep.subr.mxu0 0.0
        %613 = vmatpush1.xpose.msra.mxu0 0.0
        %614 = vmatprep.subr.mxu0 0.0
        %615 = vmatpush1.xpose.msra.mxu0 0.0
        %616 = vmatprep.subr.mxu0 0.0
        %617 = vmatpush1.xpose.msra.mxu0 0.0
        %618 = vmatprep.subr.mxu0 0.0
        %619 = vmatpush1.xpose.msra.mxu0 0.0
        %620 = vmatprep.subr.mxu0 0.0
        %621 = vmatpush1.xpose.msra.mxu0 0.0
        %622 = vmatprep.subr.mxu0 0.0
        %623 = vmatpush1.xpose.msra.mxu0 0.0
        %624 = vmatprep.subr.mxu0 0.0
        %625 = vmatpush1.xpose.msra.mxu0 0.0
        %626 = vmatprep.subr.mxu0 0.0
        %627 = vmatpush1.xpose.msra.mxu0 0.0
        %628 = vmatprep.subr.mxu0 0.0
        %629 = vmatpush1.xpose.msra.mxu0 0.0
        %630 = vmatprep.subr.mxu0 0.0
        %631 = vmatpush1.xpose.msra.mxu0 0.0
        %632 = vmatprep.subr.mxu0 0.0
        %633 = vmatpush1.xpose.msra.mxu0 0.0
        %634 = vmatprep.subr.mxu0 0.0
        %635 = vmatpush1.xpose.msra.mxu0 0.0
        %636 = vmatprep.mubr.f32.mxu0 0.0
        %637 = vmatmul.mubr.f32.gmra.mrb[0].mxu0 %v501
        %v638 = vpop.f32.mrb[0].mxu0
        %v639 = vadd.f32 0.0, %v638
        %v640 = vpop.f32.mrb[0].mxu0
        %641 = vmatprep.mubr.f32.mxu0 0.0
        %642 = vmatmul.mubr.f32.gmra.mrb[0].mxu0 %v504
        %v643 = vpop.f32.mrb[0].mxu0
        %v644 = vadd.f32 0.0, %v643
        %v645 = vpop.f32.mrb[0].mxu0
        %646 = vmatprep.mubr.f32.mxu0 0.0
        %647 = vmatmul.mubr.f32.gmra.mrb[0].mxu0 %v507
        %v648 = vpop.f32.mrb[0].mxu0
        %v649 = vadd.f32 0.0, %v648
        %v650 = vpop.f32.mrb[0].mxu0
        %651 = vmatprep.mubr.f32.mxu0 0.0
        %652 = vmatmul.mubr.f32.gmra.mrb[0].mxu0 %v510
        %v653 = vpop.f32.mrb[0].mxu0
        %v654 = vadd.f32 0.0, %v653
        %v655 = vpop.f32.mrb[0].mxu0
        %656 = vmatprep.mubr.f32.mxu0 0.0
        %657 = vmatmul.mubr.f32.gmra.mrb[0].mxu0 %v513
        %v658 = vpop.f32.mrb[0].mxu0
        %v659 = vadd.f32 0.0, %v658
        %v660 = vpop.f32.mrb[0].mxu0
        %661 = vmatprep.mubr.f32.mxu0 0.0
        %662 = vmatmul.mubr.f32.gmra.mrb[0].mxu0 %v516
        %v663 = vpop.f32.mrb[0].mxu0
        %v664 = vadd.f32 0.0, %v663
        %v665 = vpop.f32.mrb[0].mxu0
        %666 = vmatprep.mubr.f32.mxu0 0.0
        %667 = vmatmul.mubr.f32.gmra.mrb[0].mxu0 %v519
        %v668 = vpop.f32.mrb[0].mxu0
        %v669 = vadd.f32 0.0, %v668
        %v670 = vpop.f32.mrb[0].mxu0
        %671 = vmatprep.mubr.f32.mxu0 0.0
        %672 = vmatmul.mubr.f32.gmra.mrb[0].mxu0 %v522
        %v673 = vpop.f32.mrb[0].mxu0
        %v674 = vadd.f32 0.0, %v673
        %v675 = vpop.f32.mrb[0].mxu0
        %676 = vdwg.mxu0
        %v677 = vsub.f32 1.0, %v639
        %v678 = vsub.f32 1.0, %v644
        %v679 = vsub.f32 1.0, %v649
        %v680 = vsub.f32 1.0, %v654
        %v681 = vsub.f32 1.0, %v659
        %v682 = vsub.f32 1.0, %v664
        %v683 = vsub.f32 1.0, %v669
        %v684 = vsub.f32 1.0, %v674
        %v685 = vstv %s305
        %v686 = vrcp.pop %v685
        %s687 = vtos %v686
        %s688 = ssub.f32 0.0, %s687
        %v689 = vstv %s688
        %v690 = vmul.f32 %v677, %v689
        %v691 = vmul.f32 %v678, %v689
        %v692 = vmul.f32 %v679, %v689
        %v693 = vmul.f32 %v680, %v689
        %v694 = vmul.f32 %v681, %v689
        %v695 = vmul.f32 %v682, %v689
        %v696 = vmul.f32 %v683, %v689
        %v697 = vmul.f32 %v684, %v689
        %v698 = vmul.f32 %v690, 1.442695
        %v699 = vpow.pop %v698
        %v700 = vmul.f32 %v691, 1.442695
        %v701 = vpow.pop %v700
        %v702 = vmul.f32 %v692, 1.442695
        %v703 = vpow.pop %v702
        %v704 = vmul.f32 %v693, 1.442695
        %v705 = vpow.pop %v704
        %v706 = vmul.f32 %v694, 1.442695
        %v707 = vpow.pop %v706
        %v708 = vmul.f32 %v695, 1.442695
        %v709 = vpow.pop %v708
        %v710 = vmul.f32 %v696, 1.442695
        %v711 = vpow.pop %v710
        %v712 = vmul.f32 %v697, 1.442695
        %v713 = vpow.pop %v712
        %v714 = vlaneseq
        %v715 = vand.u32 %v714, 127
        %vm716 = vcmp.lt.s32.totalorder %v715, 64
        %v717 = vsel %vm716, 1, 0
        %v718 = vcvt.s32.f32 %v717
        %v719 = vmul.f32 %v699, %v718
        %v720 = vmul.f32 %v701, %v718
        %v721 = vmul.f32 %v703, %v718
        %v722 = vmul.f32 %v705, %v718
        %v723 = vmul.f32 %v707, %v718
        %v724 = vmul.f32 %v709, %v718
        %v725 = vmul.f32 %v711, %v718
        %v726 = vmul.f32 %v713, %v718
        %s727 = sadd.f32 %s306, %s305
        %v728 = vstv %s727
        %v729 = vrcp.pop %v728
        %s730 = vtos %v729
        %s731 = smul.f32 %s306, %s730
        %v732 = vmul.f32 %v719, 0.015625
        %v733 = vmul.f32 %v720, 0.015625
        %v734 = vmul.f32 %v721, 0.015625
        %v735 = vmul.f32 %v722, 0.015625
        %v736 = vmul.f32 %v723, 0.015625
        %v737 = vmul.f32 %v724, 0.015625
        %v738 = vmul.f32 %v725, 0.015625
        %v739 = vmul.f32 %v726, 0.015625
        %v740 = vadd.f32 %v732, %v733
        %v741 = vadd.f32 %v740, %v734
        %v742 = vadd.f32 %v741, %v735
        %v743 = vadd.f32 %v742, %v736
        %v744 = vadd.f32 %v743, %v737
        %v745 = vadd.f32 %v744, %v738
        %v746 = vadd.f32 %v745, %v739
        %v747 = vrot.slane %v746, 4
        %v748 = vadd.f32 %v746, %v747
        %v749 = vrot.slane %v748, 2
        %v750 = vadd.f32 %v748, %v749
        %v751 = vrot.slane %v750, 1
        %v752 = vadd.f32 %v750, %v751
        %v753 = vadd.f32 %v752, 1e-08
        %v754 = vrcp.pop %v753
        %v755 = vmul.f32 0.015625, %v754
        %v756 = vstv %s731
        %v757 = vpow.f32 %v755, %v756
        %v758 = vmul.f32 %v719, %v757
        %v759 = vmul.f32 %v720, %v757
        %v760 = vmul.f32 %v721, %v757
        %v761 = vmul.f32 %v722, %v757
        %v762 = vmul.f32 %v723, %v757
        %v763 = vmul.f32 %v724, %v757
        %v764 = vmul.f32 %v725, %v757
        %v765 = vmul.f32 %v726, %v757
        %766 = vadd.xlane.f32.xlu0 %v758
        %v767 = vpop.xlane.xlu0 %766
        %768 = vadd.xlane.f32.xlu0 %v759
        %v769 = vpop.xlane.xlu0 %768
        %770 = vadd.xlane.f32.xlu0 %v760
        %v771 = vpop.xlane.xlu0 %770
        %772 = vadd.xlane.f32.xlu0 %v761
        %v773 = vpop.xlane.xlu0 %772
        %774 = vadd.xlane.f32.xlu0 %v762
        %v775 = vpop.xlane.xlu0 %774
        %776 = vadd.xlane.f32.xlu0 %v763
        %v777 = vpop.xlane.xlu0 %776
        %778 = vadd.xlane.f32.xlu0 %v764
        %v779 = vpop.xlane.xlu0 %778
        %780 = vadd.xlane.f32.xlu0 %v765
        %v781 = vpop.xlane.xlu0 %780
        %v782 = vadd.f32 %v767, 1e-08
        %v783 = vadd.f32 %v769, 1e-08
        %v784 = vadd.f32 %v771, 1e-08
        %v785 = vadd.f32 %v773, 1e-08
        %v786 = vadd.f32 %v775, 1e-08
        %v787 = vadd.f32 %v777, 1e-08
        %v788 = vadd.f32 %v779, 1e-08
        %v789 = vadd.f32 %v781, 1e-08
        %v790 = vrcp.pop %v782
        %v791 = vmul.f32 0.015625, %v790
        %v792 = vrcp.pop %v783
        %v793 = vmul.f32 0.015625, %v792
        %v794 = vrcp.pop %v784
        %v795 = vmul.f32 0.015625, %v794
        %v796 = vrcp.pop %v785
        %v797 = vmul.f32 0.015625, %v796
        %v798 = vrcp.pop %v786
        %v799 = vmul.f32 0.015625, %v798
        %v800 = vrcp.pop %v787
        %v801 = vmul.f32 0.015625, %v800
        %v802 = vrcp.pop %v788
        %v803 = vmul.f32 0.015625, %v802
        %v804 = vrcp.pop %v789
        %v805 = vmul.f32 0.015625, %v804
        %v806 = vpow.f32 %v791, %v756
        %v807 = vpow.f32 %v793, %v756
        %v808 = vpow.f32 %v795, %v756
        %v809 = vpow.f32 %v797, %v756
        %v810 = vpow.f32 %v799, %v756
        %v811 = vpow.f32 %v801, %v756
        %v812 = vpow.f32 %v803, %v756
        %v813 = vpow.f32 %v805, %v756
        %v814 = vmul.f32 %v719, %v806
        %v815 = vmul.f32 %v720, %v807
        %v816 = vmul.f32 %v721, %v808
        %v817 = vmul.f32 %v722, %v809
        %v818 = vmul.f32 %v723, %v810
        %v819 = vmul.f32 %v724, %v811
        %v820 = vmul.f32 %v725, %v812
        %v821 = vmul.f32 %v726, %v813
        %v822 = vadd.f32 %v814, %v815
        %v823 = vadd.f32 %v822, %v816
        %v824 = vadd.f32 %v823, %v817
        %v825 = vadd.f32 %v824, %v818
        %v826 = vadd.f32 %v825, %v819
        %v827 = vadd.f32 %v826, %v820
        %v828 = vadd.f32 %v827, %v821
        %v829 = vrot.slane %v828, 4
        %v830 = vadd.f32 %v828, %v829
        %v831 = vrot.slane %v830, 2
        %v832 = vadd.f32 %v830, %v831
        %v833 = vrot.slane %v832, 1
        %v834 = vadd.f32 %v832, %v833
        %v835 = vadd.f32 %v834, 1e-08
        %v836 = vrcp.pop %v835
        %v837 = vmul.f32 0.015625, %v836
        %v838 = vpow.f32 %v837, %v756
        %v839 = vmul.f32 %v719, %v838
        %v840 = vmul.f32 %v720, %v838
        %v841 = vmul.f32 %v721, %v838
        %v842 = vmul.f32 %v722, %v838
        %v843 = vmul.f32 %v723, %v838
        %v844 = vmul.f32 %v724, %v838
        %v845 = vmul.f32 %v725, %v838
        %v846 = vmul.f32 %v726, %v838
        %847 = vadd.xlane.f32.xlu0 %v839
        %v848 = vpop.xlane.xlu0 %847
        %849 = vadd.xlane.f32.xlu0 %v840
        %v850 = vpop.xlane.xlu0 %849
        %851 = vadd.xlane.f32.xlu0 %v841
        %v852 = vpop.xlane.xlu0 %851
        %853 = vadd.xlane.f32.xlu0 %v842
        %v854 = vpop.xlane.xlu0 %853
        %855 = vadd.xlane.f32.xlu0 %v843
        %v856 = vpop.xlane.xlu0 %855
        %857 = vadd.xlane.f32.xlu0 %v844
        %v858 = vpop.xlane.xlu0 %857
        %859 = vadd.xlane.f32.xlu0 %v845
        %v860 = vpop.xlane.xlu0 %859
        %861 = vadd.xlane.f32.xlu0 %v846
        %v862 = vpop.xlane.xlu0 %861
        %v863 = vadd.f32 %v848, 1e-08
        %v864 = vadd.f32 %v850, 1e-08
        %v865 = vadd.f32 %v852, 1e-08
        %v866 = vadd.f32 %v854, 1e-08
        %v867 = vadd.f32 %v856, 1e-08
        %v868 = vadd.f32 %v858, 1e-08
        %v869 = vadd.f32 %v860, 1e-08
        %v870 = vadd.f32 %v862, 1e-08
        %v871 = vrcp.pop %v863
        %v872 = vmul.f32 0.015625, %v871
        %v873 = vrcp.pop %v864
        %v874 = vmul.f32 0.015625, %v873
        %v875 = vrcp.pop %v865
        %v876 = vmul.f32 0.015625, %v875
        %v877 = vrcp.pop %v866
        %v878 = vmul.f32 0.015625, %v877
        %v879 = vrcp.pop %v867
        %v880 = vmul.f32 0.015625, %v879
        %v881 = vrcp.pop %v868
        %v882 = vmul.f32 0.015625, %v881
        %v883 = vrcp.pop %v869
        %v884 = vmul.f32 0.015625, %v883
        %v885 = vrcp.pop %v870
        %v886 = vmul.f32 0.015625, %v885
        %v887 = vpow.f32 %v872, %v756
        %v888 = vpow.f32 %v874, %v756
        %v889 = vpow.f32 %v876, %v756
        %v890 = vpow.f32 %v878, %v756
        %v891 = vpow.f32 %v880, %v756
        %v892 = vpow.f32 %v882, %v756
        %v893 = vpow.f32 %v884, %v756
        %v894 = vpow.f32 %v886, %v756
        %v895 = vmul.f32 %v719, %v887
        %v896 = vmul.f32 %v720, %v888
        %v897 = vmul.f32 %v721, %v889
        %v898 = vmul.f32 %v722, %v890
        %v899 = vmul.f32 %v723, %v891
        %v900 = vmul.f32 %v724, %v892
        %v901 = vmul.f32 %v725, %v893
        %v902 = vmul.f32 %v726, %v894
        %v903 = vadd.f32 %v895, %v896
        %v904 = vadd.f32 %v903, %v897
        %v905 = vadd.f32 %v904, %v898
        %v906 = vadd.f32 %v905, %v899
        %v907 = vadd.f32 %v906, %v900
        %v908 = vadd.f32 %v907, %v901
        %v909 = vadd.f32 %v908, %v902
        %v910 = vrot.slane %v909, 4
        %v911 = vadd.f32 %v909, %v910
        %v912 = vrot.slane %v911, 2
        %v913 = vadd.f32 %v911, %v912
        %v914 = vrot.slane %v913, 1
        %v915 = vadd.f32 %v913, %v914
        %v916 = vadd.f32 %v915, 1e-08
        %v917 = vrcp.pop %v916
        %v918 = vmul.f32 0.015625, %v917
        %v919 = vpow.f32 %v918, %v756
        %v920 = vmul.f32 %v719, %v919
        %v921 = vmul.f32 %v720, %v919
        %v922 = vmul.f32 %v721, %v919
        %v923 = vmul.f32 %v722, %v919
        %v924 = vmul.f32 %v723, %v919
        %v925 = vmul.f32 %v724, %v919
        %v926 = vmul.f32 %v725, %v919
        %v927 = vmul.f32 %v726, %v919
        %928 = vadd.xlane.f32.xlu0 %v920
        %v929 = vpop.xlane.xlu0 %928
        %930 = vadd.xlane.f32.xlu0 %v921
        %v931 = vpop.xlane.xlu0 %930
        %932 = vadd.xlane.f32.xlu0 %v922
        %v933 = vpop.xlane.xlu0 %932
        %934 = vadd.xlane.f32.xlu0 %v923
        %v935 = vpop.xlane.xlu0 %934
        %936 = vadd.xlane.f32.xlu0 %v924
        %v937 = vpop.xlane.xlu0 %936
        %938 = vadd.xlane.f32.xlu0 %v925
        %v939 = vpop.xlane.xlu0 %938
        %940 = vadd.xlane.f32.xlu0 %v926
        %v941 = vpop.xlane.xlu0 %940
        %942 = vadd.xlane.f32.xlu0 %v927
        %v943 = vpop.xlane.xlu0 %942
        %v944 = vadd.f32 %v929, 1e-08
        %v945 = vadd.f32 %v931, 1e-08
        %v946 = vadd.f32 %v933, 1e-08
        %v947 = vadd.f32 %v935, 1e-08
        %v948 = vadd.f32 %v937, 1e-08
        %v949 = vadd.f32 %v939, 1e-08
        %v950 = vadd.f32 %v941, 1e-08
        %v951 = vadd.f32 %v943, 1e-08
        %v952 = vrcp.pop %v944
        %v953 = vmul.f32 0.015625, %v952
        %v954 = vrcp.pop %v945
        %v955 = vmul.f32 0.015625, %v954
        %v956 = vrcp.pop %v946
        %v957 = vmul.f32 0.015625, %v956
        %v958 = vrcp.pop %v947
        %v959 = vmul.f32 0.015625, %v958
        %v960 = vrcp.pop %v948
        %v961 = vmul.f32 0.015625, %v960
        %v962 = vrcp.pop %v949
        %v963 = vmul.f32 0.015625, %v962
        %v964 = vrcp.pop %v950
        %v965 = vmul.f32 0.015625, %v964
        %v966 = vrcp.pop %v951
        %v967 = vmul.f32 0.015625, %v966
        %v968 = vpow.f32 %v953, %v756
        %v969 = vpow.f32 %v955, %v756
        %v970 = vpow.f32 %v957, %v756
        %v971 = vpow.f32 %v959, %v756
        %v972 = vpow.f32 %v961, %v756
        %v973 = vpow.f32 %v963, %v756
        %v974 = vpow.f32 %v965, %v756
        %v975 = vpow.f32 %v967, %v756
        %v976 = vmul.f32 %v719, %v968
        %v977 = vmul.f32 %v720, %v969
        %v978 = vmul.f32 %v721, %v970
        %v979 = vmul.f32 %v722, %v971
        %v980 = vmul.f32 %v723, %v972
        %v981 = vmul.f32 %v724, %v973
        %v982 = vmul.f32 %v725, %v974
        %v983 = vmul.f32 %v726, %v975
        %v984 = vadd.f32 %v976, %v977
        %v985 = vadd.f32 %v984, %v978
        %v986 = vadd.f32 %v985, %v979
        %v987 = vadd.f32 %v986, %v980
        %v988 = vadd.f32 %v987, %v981
        %v989 = vadd.f32 %v988, %v982
        %v990 = vadd.f32 %v989, %v983
        %v991 = vrot.slane %v990, 4
        %v992 = vadd.f32 %v990, %v991
        %v993 = vrot.slane %v992, 2
        %v994 = vadd.f32 %v992, %v993
        %v995 = vrot.slane %v994, 1
        %v996 = vadd.f32 %v994, %v995
        %v997 = vadd.f32 %v996, 1e-08
        %v998 = vrcp.pop %v997
        %v999 = vmul.f32 0.015625, %v998
        %v1000 = vpow.f32 %v999, %v756
        %v1001 = vmul.f32 %v719, %v1000
        %v1002 = vmul.f32 %v720, %v1000
        %v1003 = vmul.f32 %v721, %v1000
        %v1004 = vmul.f32 %v722, %v1000
        %v1005 = vmul.f32 %v723, %v1000
        %v1006 = vmul.f32 %v724, %v1000
        %v1007 = vmul.f32 %v725, %v1000
        %v1008 = vmul.f32 %v726, %v1000
        %1009 = vadd.xlane.f32.xlu0 %v1001
        %v1010 = vpop.xlane.xlu0 %1009
        %1011 = vadd.xlane.f32.xlu0 %v1002
        %v1012 = vpop.xlane.xlu0 %1011
        %1013 = vadd.xlane.f32.xlu0 %v1003
        %v1014 = vpop.xlane.xlu0 %1013
        %1015 = vadd.xlane.f32.xlu0 %v1004
        %v1016 = vpop.xlane.xlu0 %1015
        %1017 = vadd.xlane.f32.xlu0 %v1005
        %v1018 = vpop.xlane.xlu0 %1017
        %1019 = vadd.xlane.f32.xlu0 %v1006
        %v1020 = vpop.xlane.xlu0 %1019
        %1021 = vadd.xlane.f32.xlu0 %v1007
        %v1022 = vpop.xlane.xlu0 %1021
        %1023 = vadd.xlane.f32.xlu0 %v1008
        %v1024 = vpop.xlane.xlu0 %1023
        %v1025 = vadd.f32 %v1010, 1e-08
        %v1026 = vadd.f32 %v1012, 1e-08
        %v1027 = vadd.f32 %v1014, 1e-08
        %v1028 = vadd.f32 %v1016, 1e-08
        %v1029 = vadd.f32 %v1018, 1e-08
        %v1030 = vadd.f32 %v1020, 1e-08
        %v1031 = vadd.f32 %v1022, 1e-08
        %v1032 = vadd.f32 %v1024, 1e-08
        %v1033 = vrcp.pop %v1025
        %v1034 = vmul.f32 0.015625, %v1033
        %v1035 = vrcp.pop %v1026
        %v1036 = vmul.f32 0.015625, %v1035
        %v1037 = vrcp.pop %v1027
        %v1038 = vmul.f32 0.015625, %v1037
        %v1039 = vrcp.pop %v1028
        %v1040 = vmul.f32 0.015625, %v1039
        %v1041 = vrcp.pop %v1029
        %v1042 = vmul.f32 0.015625, %v1041
        %v1043 = vrcp.pop %v1030
        %v1044 = vmul.f32 0.015625, %v1043
        %v1045 = vrcp.pop %v1031
        %v1046 = vmul.f32 0.015625, %v1045
        %v1047 = vrcp.pop %v1032
        %v1048 = vmul.f32 0.015625, %v1047
        %v1049 = vpow.f32 %v1034, %v756
        %v1050 = vpow.f32 %v1036, %v756
        %v1051 = vpow.f32 %v1038, %v756
        %v1052 = vpow.f32 %v1040, %v756
        %v1053 = vpow.f32 %v1042, %v756
        %v1054 = vpow.f32 %v1044, %v756
        %v1055 = vpow.f32 %v1046, %v756
        %v1056 = vpow.f32 %v1048, %v756
        %v1057 = vmul.f32 %v719, %v1049
        %v1058 = vmul.f32 %v720, %v1050
        %v1059 = vmul.f32 %v721, %v1051
        %v1060 = vmul.f32 %v722, %v1052
        %v1061 = vmul.f32 %v723, %v1053
        %v1062 = vmul.f32 %v724, %v1054
        %v1063 = vmul.f32 %v725, %v1055
        %v1064 = vmul.f32 %v726, %v1056
        %v1065 = vadd.f32 %v1057, %v1058
        %v1066 = vadd.f32 %v1065, %v1059
        %v1067 = vadd.f32 %v1066, %v1060
        %v1068 = vadd.f32 %v1067, %v1061
        %v1069 = vadd.f32 %v1068, %v1062
        %v1070 = vadd.f32 %v1069, %v1063
        %v1071 = vadd.f32 %v1070, %v1064
        %v1072 = vrot.slane %v1071, 4
        %v1073 = vadd.f32 %v1071, %v1072
        %v1074 = vrot.slane %v1073, 2
        %v1075 = vadd.f32 %v1073, %v1074
        %v1076 = vrot.slane %v1075, 1
        %v1077 = vadd.f32 %v1075, %v1076
        %v1078 = vadd.f32 %v1077, 1e-08
        %v1079 = vrcp.pop %v1078
        %v1080 = vmul.f32 0.015625, %v1079
        %v1081 = vpow.f32 %v1080, %v756
        %v1082 = vmul.f32 %v719, %v1081
        %v1083 = vmul.f32 %v720, %v1081
        %v1084 = vmul.f32 %v721, %v1081
        %v1085 = vmul.f32 %v722, %v1081
        %v1086 = vmul.f32 %v723, %v1081
        %v1087 = vmul.f32 %v724, %v1081
        %v1088 = vmul.f32 %v725, %v1081
        %v1089 = vmul.f32 %v726, %v1081
        %1090 = vadd.xlane.f32.xlu0 %v1082
        %v1091 = vpop.xlane.xlu0 %1090
        %1092 = vadd.xlane.f32.xlu0 %v1083
        %v1093 = vpop.xlane.xlu0 %1092
        %1094 = vadd.xlane.f32.xlu0 %v1084
        %v1095 = vpop.xlane.xlu0 %1094
        %1096 = vadd.xlane.f32.xlu0 %v1085
        %v1097 = vpop.xlane.xlu0 %1096
        %1098 = vadd.xlane.f32.xlu0 %v1086
        %v1099 = vpop.xlane.xlu0 %1098
        %1100 = vadd.xlane.f32.xlu0 %v1087
        %v1101 = vpop.xlane.xlu0 %1100
        %1102 = vadd.xlane.f32.xlu0 %v1088
        %v1103 = vpop.xlane.xlu0 %1102
        %1104 = vadd.xlane.f32.xlu0 %v1089
        %v1105 = vpop.xlane.xlu0 %1104
        %v1106 = vadd.f32 %v1091, 1e-08
        %v1107 = vadd.f32 %v1093, 1e-08
        %v1108 = vadd.f32 %v1095, 1e-08
        %v1109 = vadd.f32 %v1097, 1e-08
        %v1110 = vadd.f32 %v1099, 1e-08
        %v1111 = vadd.f32 %v1101, 1e-08
        %v1112 = vadd.f32 %v1103, 1e-08
        %v1113 = vadd.f32 %v1105, 1e-08
        %v1114 = vrcp.pop %v1106
        %v1115 = vmul.f32 0.015625, %v1114
        %v1116 = vrcp.pop %v1107
        %v1117 = vmul.f32 0.015625, %v1116
        %v1118 = vrcp.pop %v1108
        %v1119 = vmul.f32 0.015625, %v1118
        %v1120 = vrcp.pop %v1109
        %v1121 = vmul.f32 0.015625, %v1120
        %v1122 = vrcp.pop %v1110
        %v1123 = vmul.f32 0.015625, %v1122
        %v1124 = vrcp.pop %v1111
        %v1125 = vmul.f32 0.015625, %v1124
        %v1126 = vrcp.pop %v1112
        %v1127 = vmul.f32 0.015625, %v1126
        %v1128 = vrcp.pop %v1113
        %v1129 = vmul.f32 0.015625, %v1128
        %v1130 = vpow.f32 %v1115, %v756
        %v1131 = vpow.f32 %v1117, %v756
        %v1132 = vpow.f32 %v1119, %v756
        %v1133 = vpow.f32 %v1121, %v756
        %v1134 = vpow.f32 %v1123, %v756
        %v1135 = vpow.f32 %v1125, %v756
        %v1136 = vpow.f32 %v1127, %v756
        %v1137 = vpow.f32 %v1129, %v756
        %v1138 = vmul.f32 %v1130, %v719
        %v1139 = vmul.f32 %v1131, %v720
        %v1140 = vmul.f32 %v1132, %v721
        %v1141 = vmul.f32 %v1133, %v722
        %v1142 = vmul.f32 %v1134, %v723
        %v1143 = vmul.f32 %v1135, %v724
        %v1144 = vmul.f32 %v1136, %v725
        %v1145 = vmul.f32 %v1137, %v726
        %v1146 = vmul.f32 %v1138, %v1081
        %v1147 = vmul.f32 %v1139, %v1081
        %v1148 = vmul.f32 %v1140, %v1081
        %v1149 = vmul.f32 %v1141, %v1081
        %v1150 = vmul.f32 %v1142, %v1081
        %v1151 = vmul.f32 %v1143, %v1081
        %v1152 = vmul.f32 %v1144, %v1081
        %v1153 = vmul.f32 %v1145, %v1081
        %v1154 = vmul.f32 %v1130, %v1091
        %v1155 = vmul.f32 %v1131, %v1093
        %v1156 = vmul.f32 %v1132, %v1095
        %v1157 = vmul.f32 %v1133, %v1097
        %v1158 = vmul.f32 %v1134, %v1099
        %v1159 = vmul.f32 %v1135, %v1101
        %v1160 = vmul.f32 %v1136, %v1103
        %v1161 = vmul.f32 %v1137, %v1105
        %1162 = vst [vmem:[%s277] sm:$0xff] %v1146
        %1163 = vst [vmem:[%s277 + $0x8] sm:$0xff] %v1147
        %1164 = vst [vmem:[%s277 + $0x10] sm:$0xff] %v1148
        %1165 = vst [vmem:[%s277 + $0x18] sm:$0xff] %v1149
        %1166 = vst [vmem:[%s277 + $0x20] sm:$0xff] %v1150
        %1167 = vst [vmem:[%s277 + $0x28] sm:$0xff] %v1151
        %1168 = vst [vmem:[%s277 + $0x30] sm:$0xff] %v1152
        %1169 = vst [vmem:[%s277 + $0x38] sm:$0xff] %v1153
        %v1170 = vld [vmem:[%s299] sm:$0xff]
        %v1171 = vld [vmem:[%s299 + $0x8] sm:$0xff]
        %v1172 = vld [vmem:[%s299 + $0x10] sm:$0xff]
        %v1173 = vld [vmem:[%s299 + $0x18] sm:$0xff]
        %v1174 = vld [vmem:[%s299 + $0x20] sm:$0xff]
        %v1175 = vld [vmem:[%s299 + $0x28] sm:$0xff]
        %v1176 = vld [vmem:[%s299 + $0x30] sm:$0xff]
        %v1177 = vld [vmem:[%s299 + $0x38] sm:$0xff]
        %v1178 = vld [vmem:[%s299 + $0x40] sm:$0xff]
        %v1179 = vld [vmem:[%s299 + $0x48] sm:$0xff]
        %v1180 = vld [vmem:[%s299 + $0x50] sm:$0xff]
        %v1181 = vld [vmem:[%s299 + $0x58] sm:$0xff]
        %v1182 = vld [vmem:[%s299 + $0x60] sm:$0xff]
        %v1183 = vld [vmem:[%s299 + $0x68] sm:$0xff]
        %v1184 = vld [vmem:[%s299 + $0x70] sm:$0xff]
        %v1185 = vld [vmem:[%s299 + $0x78] sm:$0xff]
        %1186 = vmatprep.subr.mxu0 0.0
        %1187 = vmatpush1.msra.mxu0 %v1170
        %1188 = vmatprep.subr.mxu0 0.0
        %1189 = vmatpush1.msra.mxu0 %v1171
        %1190 = vmatprep.subr.mxu0 0.0
        %1191 = vmatpush1.msra.mxu0 %v1172
        %1192 = vmatprep.subr.mxu0 0.0
        %1193 = vmatpush1.msra.mxu0 %v1173
        %1194 = vmatprep.subr.mxu0 0.0
        %1195 = vmatpush1.msra.mxu0 %v1174
        %1196 = vmatprep.subr.mxu0 0.0
        %1197 = vmatpush1.msra.mxu0 %v1175
        %1198 = vmatprep.subr.mxu0 0.0
        %1199 = vmatpush1.msra.mxu0 %v1176
        %1200 = vmatprep.subr.mxu0 0.0
        %1201 = vmatpush1.msra.mxu0 %v1177
        %1202 = vmatprep.subr.mxu0 0.0
        %1203 = vmatpush1.msra.mxu0 %v1178
        %1204 = vmatprep.subr.mxu0 0.0
        %1205 = vmatpush1.msra.mxu0 %v1179
        %1206 = vmatprep.subr.mxu0 0.0
        %1207 = vmatpush1.msra.mxu0 %v1180
        %1208 = vmatprep.subr.mxu0 0.0
        %1209 = vmatpush1.msra.mxu0 %v1181
        %1210 = vmatprep.subr.mxu0 0.0
        %1211 = vmatpush1.msra.mxu0 %v1182
        %1212 = vmatprep.subr.mxu0 0.0
        %1213 = vmatpush1.msra.mxu0 %v1183
        %1214 = vmatprep.subr.mxu0 0.0
        %1215 = vmatpush1.msra.mxu0 %v1184
        %1216 = vmatprep.subr.mxu0 0.0
        %1217 = vmatpush1.msra.mxu0 %v1185
        %1218 = vmatprep.subr.mxu0 0.0
        %1219 = vmatpush1.msra.mxu0 0.0
        %1220 = vmatprep.subr.mxu0 0.0
        %1221 = vmatpush1.msra.mxu0 0.0
        %1222 = vmatprep.subr.mxu0 0.0
        %1223 = vmatpush1.msra.mxu0 0.0
        %1224 = vmatprep.subr.mxu0 0.0
        %1225 = vmatpush1.msra.mxu0 0.0
        %1226 = vmatprep.subr.mxu0 0.0
        %1227 = vmatpush1.msra.mxu0 0.0
        %1228 = vmatprep.subr.mxu0 0.0
        %1229 = vmatpush1.msra.mxu0 0.0
        %1230 = vmatprep.subr.mxu0 0.0
        %1231 = vmatpush1.msra.mxu0 0.0
        %1232 = vmatprep.subr.mxu0 0.0
        %1233 = vmatpush1.msra.mxu0 0.0
        %1234 = vmatprep.subr.mxu0 0.0
        %1235 = vmatpush1.msra.mxu0 0.0
        %1236 = vmatprep.subr.mxu0 0.0
        %1237 = vmatpush1.msra.mxu0 0.0
        %1238 = vmatprep.subr.mxu0 0.0
        %1239 = vmatpush1.msra.mxu0 0.0
        %1240 = vmatprep.subr.mxu0 0.0
        %1241 = vmatpush1.msra.mxu0 0.0
        %1242 = vmatprep.subr.mxu0 0.0
        %1243 = vmatpush1.msra.mxu0 0.0
        %1244 = vmatprep.subr.mxu0 0.0
        %1245 = vmatpush1.msra.mxu0 0.0
        %1246 = vmatprep.subr.mxu0 0.0
        %1247 = vmatpush1.msra.mxu0 0.0
        %1248 = vmatprep.subr.mxu0 0.0
        %1249 = vmatpush1.msra.mxu0 0.0
        %1250 = vmatprep.mubr.f32.mxu0 0.0
        %1251 = vmatmul.mubr.f32.gmra.mrb[0].mxu0 %v1146
        %v1252 = vpop.f32.mrb[0].mxu0
        %v1253 = vadd.f32 0.0, %v1252
        %v1254 = vpop.f32.mrb[0].mxu0
        %1255 = vmatprep.mubr.f32.mxu0 0.0
        %1256 = vmatmul.mubr.f32.gmra.mrb[0].mxu0 %v1147
        %v1257 = vpop.f32.mrb[0].mxu0
        %v1258 = vadd.f32 0.0, %v1257
        %v1259 = vpop.f32.mrb[0].mxu0
        %1260 = vmatprep.mubr.f32.mxu0 0.0
        %1261 = vmatmul.mubr.f32.gmra.mrb[0].mxu0 %v1148
        %v1262 = vpop.f32.mrb[0].mxu0
        %v1263 = vadd.f32 0.0, %v1262
        %v1264 = vpop.f32.mrb[0].mxu0
        %1265 = vmatprep.mubr.f32.mxu0 0.0
        %1266 = vmatmul.mubr.f32.gmra.mrb[0].mxu0 %v1149
        %v1267 = vpop.f32.mrb[0].mxu0
        %v1268 = vadd.f32 0.0, %v1267
        %v1269 = vpop.f32.mrb[0].mxu0
        %1270 = vmatprep.mubr.f32.mxu0 0.0
        %1271 = vmatmul.mubr.f32.gmra.mrb[0].mxu0 %v1150
        %v1272 = vpop.f32.mrb[0].mxu0
        %v1273 = vadd.f32 0.0, %v1272
        %v1274 = vpop.f32.mrb[0].mxu0
        %1275 = vmatprep.mubr.f32.mxu0 0.0
        %1276 = vmatmul.mubr.f32.gmra.mrb[0].mxu0 %v1151
        %v1277 = vpop.f32.mrb[0].mxu0
        %v1278 = vadd.f32 0.0, %v1277
        %v1279 = vpop.f32.mrb[0].mxu0
        %1280 = vmatprep.mubr.f32.mxu0 0.0
        %1281 = vmatmul.mubr.f32.gmra.mrb[0].mxu0 %v1152
        %v1282 = vpop.f32.mrb[0].mxu0
        %v1283 = vadd.f32 0.0, %v1282
        %v1284 = vpop.f32.mrb[0].mxu0
        %1285 = vmatprep.mubr.f32.mxu0 0.0
        %1286 = vmatmul.mubr.f32.gmra.mrb[0].mxu0 %v1153
        %v1287 = vpop.f32.mrb[0].mxu0
        %v1288 = vadd.f32 0.0, %v1287
        %v1289 = vpop.f32.mrb[0].mxu0
        %1290 = vdwg.mxu0
        %v1291 = vadd.f32 %v1154, 1e-08
        %v1292 = vadd.f32 %v1155, 1e-08
        %v1293 = vadd.f32 %v1156, 1e-08
        %v1294 = vadd.f32 %v1157, 1e-08
        %v1295 = vadd.f32 %v1158, 1e-08
        %v1296 = vadd.f32 %v1159, 1e-08
        %v1297 = vadd.f32 %v1160, 1e-08
        %v1298 = vadd.f32 %v1161, 1e-08
        %v1299 = vrcp.pop %v1291
        %v1300 = vmul.f32 %v1253, %v1299
        %v1301 = vrcp.pop %v1292
        %v1302 = vmul.f32 %v1258, %v1301
        %v1303 = vrcp.pop %v1293
        %v1304 = vmul.f32 %v1263, %v1303
        %v1305 = vrcp.pop %v1294
        %v1306 = vmul.f32 %v1268, %v1305
        %v1307 = vrcp.pop %v1295
        %v1308 = vmul.f32 %v1273, %v1307
        %v1309 = vrcp.pop %v1296
        %v1310 = vmul.f32 %v1278, %v1309
        %v1311 = vrcp.pop %v1297
        %v1312 = vmul.f32 %v1283, %v1311
        %v1313 = vrcp.pop %v1298
        %v1314 = vmul.f32 %v1288, %v1313
        %1323 = vrot.lane.b32.xlu0 %v1300, 1
        %v1324 = vpop.permute.xlu0 %1323
        %1325 = vrot.lane.b32.xlu0 %v1302, 1
        %v1326 = vpop.permute.xlu0 %1325
        %1327 = vrot.lane.b32.xlu0 %v1304, 1
        %v1328 = vpop.permute.xlu0 %1327
        %1329 = vrot.lane.b32.xlu0 %v1306, 1
        %v1330 = vpop.permute.xlu0 %1329
        %1331 = vrot.lane.b32.xlu0 %v1308, 1
        %v1332 = vpop.permute.xlu0 %1331
        %1333 = vrot.lane.b32.xlu0 %v1310, 1
        %v1334 = vpop.permute.xlu0 %1333
        %1335 = vrot.lane.b32.xlu0 %v1312, 1
        %v1336 = vpop.permute.xlu0 %1335
        %1337 = vrot.lane.b32.xlu0 %v1314, 1
        %v1338 = vpop.permute.xlu0 %1337
        %vm1347 = vcmask 7168
        %v1348 = vsel %vm1347, %v1154, %v1324
        %v1349 = vsel %vm1347, %v1155, %v1326
        %v1350 = vsel %vm1347, %v1156, %v1328
        %v1351 = vsel %vm1347, %v1157, %v1330
        %v1352 = vsel %vm1347, %v1158, %v1332
        %v1353 = vsel %vm1347, %v1159, %v1334
        %v1354 = vsel %vm1347, %v1160, %v1336
        %v1355 = vsel %vm1347, %v1161, %v1338
        %vm1356 = vcmask 31744
        %1357 = vst.msk [vmem:[%s304] sm:$0xff] %vm1356, %v1348
        %1358 = vst.msk [vmem:[%s304 + $0x8] sm:$0xff] %vm1356, %v1349
        %1359 = vst.msk [vmem:[%s304 + $0x10] sm:$0xff] %vm1356, %v1350
        %1360 = vst.msk [vmem:[%s304 + $0x18] sm:$0xff] %vm1356, %v1351
        %1361 = vst.msk [vmem:[%s304 + $0x20] sm:$0xff] %vm1356, %v1352
        %1362 = vst.msk [vmem:[%s304 + $0x28] sm:$0xff] %vm1356, %v1353
        %1363 = vst.msk [vmem:[%s304 + $0x30] sm:$0xff] %vm1356, %v1354
        %1364 = vst.msk [vmem:[%s304 + $0x38] sm:$0xff] %vm1356, %v1355
        %s1365 = sand.u32 %s151, 1
        %s1366 = scalar_lea.sflag [#allocation5], %s1365
        %s1367 = sand.u32 %s151, 1
        %s1368 = smul.addr %s1367, 64
        %s1369 = scalar_lea.vmem [#allocation4], %s1368
        %p1370 = scmp.lt.s32.totalorder %s23, 1
        %s1371 = scalar_select %p1370, %s23, 1
        %s1372 = smul.addr %s1371, 8
        %s1373 = smul.addr %s1372, 8
        %s1374 = scalar_lea.vmem %s6, %s1373
        // Predicated region
        $region41: #{tpu_custom_call.1} parent=39 // pred_check
          %p1375 = pneg %p161
        $region42: #{tpu_custom_call.1} parent=39 // pred_check_branch
          %1377 = sbr.rel (%p1375) target = $region44
        $region43: #{tpu_custom_call.1} parent=39 // pred_region
          %s1379 = ssub.s32 1024, 1024
          %1380 = vsyncadd %s1366, %s1379
          %s1381 = smul.addr %s23, 8
          %s1382 = smul.addr %s1381, 128
          %s1383 = scalar_lea.hbm %s5, %s1382
          %s1384 = sshll.u32 %s1369, 4
          %s1385 = int_to_ptr.vmem [resolvable:$true] %s1384
          %1390 = dma.vmem_to_hbm [thread:$0]  %s1385, 1024, %s1383, %s1366, 128, 128, 8
        $region44: #{tpu_custom_call.1} parent=39 // pred_fallthru
          _
        // Predicated region
        $region45: #{tpu_custom_call.1} parent=39 // pred_check
          %p1391 = pneg %p187
        $region46: #{tpu_custom_call.1} parent=39 // pred_check_branch
          %1393 = sbr.rel (%p1391) target = $region48
        $region47: #{tpu_custom_call.1} parent=39 // pred_region
          _
        $region48: #{tpu_custom_call.1} parent=39 // pred_fallthru
          _
      $region40: #{tpu_custom_call.1} parent=5 // pred_fallthru
        _
      %p1394 = scmp.le.s32.totalorder 2, %s18
      // Predicated region
      $region49: #{tpu_custom_call.1} parent=5 // pred_check
        %p1395 = pneg %p1394
      $region50: #{tpu_custom_call.1} parent=5 // pred_check_branch
        %1397 = sbr.rel (%p1395) target = $region52
      $region51: #{tpu_custom_call.1} parent=5 // pred_region
        %s1398 = ssub.s32 %s18, 2
        // Predicated region
        $region53: #{tpu_custom_call.1} parent=51 // pred_check
          %p1399 = pneg %p167
        $region54: #{tpu_custom_call.1} parent=51 // pred_check_branch
          %1401 = sbr.rel (%p1399) target = $region56
        $region55: #{tpu_custom_call.1} parent=51 // pred_region
          %s1402 = sand.u32 %s152, 1
          %s1403 = scalar_lea.sflag [#allocation5], %s1402
          %s1404 = sand.u32 %s152, 1
          %s1405 = smul.addr %s1404, 64
          %s1406 = scalar_lea.vmem [#allocation4], %s1405
          %1407 = dma.done %s1403, 1024
        $region56: #{tpu_custom_call.1} parent=51 // pred_fallthru
          _
        // Predicated region
        $region57: #{tpu_custom_call.1} parent=51 // pred_check
          %p1408 = pneg %p193
        $region58: #{tpu_custom_call.1} parent=51 // pred_check_branch
          %1410 = sbr.rel (%p1408) target = $region60
        $region59: #{tpu_custom_call.1} parent=51 // pred_region
          %p1411 = scmp.lt.s32.totalorder %s24, 1
          %s1412 = scalar_select %p1411, %s24, 1
          %s1413 = smul.addr %s1412, 8
          %s1414 = smul.addr %s1413, 8
          %s1415 = scalar_lea.vmem %s6, %s1414
        $region60: #{tpu_custom_call.1} parent=51 // pred_fallthru
          _
      $region52: #{tpu_custom_call.1} parent=5 // pred_fallthru
        _
    $region6: #{tpu_custom_call.1} parent=1 // loop_footer
      %s22 = sadd.s32 1, %s18
    $region7: #{tpu_custom_call.1} parent=1 // loop_footer_branch
      %17 = sbr.rel target = $region3
    $region8: #{tpu_custom_call.1} parent=1 // loop_exit
      _
    %1416 = vsyncpa [#allocation5], 1
    %s1417 = scalar_lea.sflag [#allocation5], 1
    %1418 = vsyncpa %s1417, 1

</llo_original>
